<compile_context>
chip_gen: v7x
topology: tpu7x:2x2x1
jax: 0.10.0
libtpu: 0.0.40
codegen_flags: <defaults>
</compile_context>

<pallas_src>
import functools
import math

import jax
import jax.numpy as jnp
from jax.experimental import pallas as pl
from jax.experimental.pallas import tpu as pltpu  # noqa: F401  (kept for TPU-specific tuning hooks)

# ----------------------- scaled-down bert-base-uncased config -----------------------
VOCAB = 128
TYPE_VOCAB = 2
MAX_POS = 16
HIDDEN = 32            # bert-base: 768
HEADS = 2              # bert-base: 12
HEAD_DIM = HIDDEN // HEADS
INTERMEDIATE = 64      # bert-base: 3072
LAYERS = 2             # bert-base: 12
LABELS = 90            # as in the PyTorch module
LABELS_PAD = 128       # lane-dense classifier output (sliced back to 90 in the wrapper)
LN_EPS = 1e-12

# ---- packed bias / LayerNorm-param array ("vecs", shape (VEC_ROWS, 128) f32) row layout ----
ROW_EMB_G = 0
ROW_EMB_B = 1
ROWS_PER_LAYER = 8
OFF_BQKV, OFF_BO, OFF_LN1G, OFF_LN1B, OFF_BI, OFF_BF, OFF_LN2G, OFF_LN2B = range(8)


def layer_base(l):
    return 2 + l * ROWS_PER_LAYER


ROW_CLS_B = 2 + LAYERS * ROWS_PER_LAYER
VEC_ROWS = ROW_CLS_B + 1

# ---- packed H-input weight array ("w_h", shape (LAYERS+1, H, WH_COLS) bf16) column layout ----
COL_WQKV = 0                        # width 3*HIDDEN
COL_WO = 3 * HIDDEN                 # width HIDDEN
COL_WI = 4 * HIDDEN                 # width INTERMEDIATE
WH_COLS = 4 * HIDDEN + INTERMEDIATE  # 224
CLS_SLAB = LAYERS                   # classifier weight in cols 0:LABELS_PAD of slab LAYERS

# ---- packed embedding table ("emb_tables", shape (VOCAB+MAX_POS+TYPE_VOCAB, H) f32) ----
ROW_WORD = 0
ROW_POS = VOCAB
ROW_TYPE = VOCAB + MAX_POS


# ---------------------------------- fused Pallas kernel -------------------------------
def _bert_kernel(ints_ref, mask_ref, emb_tab_ref, vecs_ref, wh_ref, wf_ref, out_ref,
                 *, batch, seq, out_rows):
    bs = batch * seq
    scale = 1.0 / math.sqrt(HEAD_DIM)
    inv_sqrt2 = 1.0 / math.sqrt(2.0)

    def mm(a, w):
        # bf16 MXU inputs, f32 accumulation (weights are already bf16; activations cast here).
        return jnp.dot(a.astype(jnp.bfloat16), w.astype(jnp.bfloat16),
                       preferred_element_type=jnp.float32)

    def vec(row, width):
        # (1, width) f32 slice of the packed bias / LN-param array.
        return vecs_ref[row:row + 1, 0:width]

    def layernorm(x, g_row, b_row):
        # stats over the true H=32 elements (activations are NOT lane-padded).
        mean = jnp.mean(x, axis=-1, keepdims=True)
        var = jnp.mean(jnp.square(x - mean), axis=-1, keepdims=True)
        return (x - mean) * jax.lax.rsqrt(var + LN_EPS) * vec(g_row, HIDDEN) + vec(b_row, HIDDEN)

    def erf(x):
        # Abramowitz & Stegun 7.1.26, |err| <= 1.5e-7 — exact-GELU semantics without relying
        # on an erf lowering; uses only exp / mul / add / select.
        a1, a2, a3, a4, a5 = 0.254829592, -0.284496736, 1.421413741, -1.453152027, 1.061405429
        pp = 0.3275911
        ax = jnp.abs(x)
        t = 1.0 / (1.0 + pp * ax)
        poly = ((((a5 * t + a4) * t + a3) * t + a2) * t + a1) * t
        y = 1.0 - poly * jnp.exp(-ax * ax)
        return jnp.where(x >= 0.0, y, -y)

    # ---- embeddings, fully in-kernel (one-hot matmul gather; VOCAB=128 fits VMEM) ----
    ids_col = ints_ref[:, 0:1]                                              # (B*S, 1) int32
    iota_v = jax.lax.broadcasted_iota(jnp.int32, (bs, VOCAB), 1)            # (B*S, VOCAB)
    onehot = (ids_col == iota_v).astype(jnp.float32)                        # (B*S, VOCAB)
    word = jnp.dot(onehot, emb_tab_ref[ROW_WORD:ROW_WORD + VOCAB, :],
                   preferred_element_type=jnp.float32)                      # exact f32 row select
    pos = jnp.tile(emb_tab_ref[ROW_POS:ROW_POS + seq, :], (batch, 1))       # (B*S, H)
    tt = ints_ref[:, 1:2].astype(jnp.float32)                               # (B*S, 1) in {0,1}
    t0 = emb_tab_ref[ROW_TYPE:ROW_TYPE + 1, :]
    t1 = emb_tab_ref[ROW_TYPE + 1:ROW_TYPE + 2, :]
    tok = t0 + tt * (t1 - t0)                                               # (B*S, H)
    x = layernorm(word + pos + tok, ROW_EMB_G, ROW_EMB_B)                   # (B*S, H) f32

    # ---- HF-style additive attention bias, built & broadcast ONCE (hoisted out of loops) ----
    neg = (1.0 - mask_ref[...]) * -10000.0                                  # (B, S)
    bias_bqk = jnp.broadcast_to(neg[:, None, :], (batch, seq, seq))         # (B, S, S)

    for l in range(LAYERS):                          # static unroll (LAYERS = 2)
        base = layer_base(l)
        wh_l = wh_ref[l]                                                    # (H, WH_COLS) bf16
        wqkv = wh_l[:, COL_WQKV:COL_WQKV + 3 * HIDDEN]
        wo = wh_l[:, COL_WO:COL_WO + HIDDEN]
        wi = wh_l[:, COL_WI:COL_WI + INTERMEDIATE]
        wf = wf_ref[l]                                                      # (I, H) bf16

        # fused QKV projection: one MXU pass over all tokens
        qkv = mm(x, wqkv) + vec(base + OFF_BQKV, 3 * HIDDEN)                # (B*S, 3H)
        qkv3 = qkv.reshape(batch, seq, 3 * HIDDEN)

        # attention: per head (HEADS=2), matmuls batched over the batch dim
        ctx_heads = []
        for h in range(HEADS):
            c0 = h * HEAD_DIM
            q = qkv3[:, :, c0:c0 + HEAD_DIM].astype(jnp.bfloat16)
            k = qkv3[:, :, HIDDEN + c0:HIDDEN + c0 + HEAD_DIM].astype(jnp.bfloat16)
            v = qkv3[:, :, 2 * HIDDEN + c0:2 * HIDDEN + c0 + HEAD_DIM].astype(jnp.bfloat16)
            s = jnp.einsum('bqd,bkd->bqk', q, k,
                           preferred_element_type=jnp.float32) * scale + bias_bqk
            s = s - jnp.max(s, axis=-1, keepdims=True)
            p = jnp.exp(s)
            # approx reciprocal (EUP slot): probs sum to 1 +/- ~1e-3, below bf16-matmul noise.
            p = p * pl.reciprocal(jnp.sum(p, axis=-1, keepdims=True), approx=True)
            ctx_heads.append(jnp.einsum('bqk,bkd->bqd', p.astype(jnp.bfloat16), v,
                                        preferred_element_type=jnp.float32))   # (B, S, Dh)
        ctx = jnp.concatenate(ctx_heads, axis=-1).reshape(bs, HIDDEN)       # merged heads, no scratch

        # output projection + residual + LN1
        attn_out = mm(ctx, wo) + vec(base + OFF_BO, HIDDEN)
        x = layernorm(attn_out + x, base + OFF_LN1G, base + OFF_LN1B)

        # FFN: exact-erf GELU, residual + LN2
        inter = mm(x, wi) + vec(base + OFF_BI, INTERMEDIATE)
        inter = 0.5 * inter * (1.0 + erf(inter * inv_sqrt2))
        ffn_out = mm(inter, wf) + vec(base + OFF_BF, HIDDEN)
        x = layernorm(ffn_out + x, base + OFF_LN2G, base + OFF_LN2B)

    # ---- CLS pooling (Dropout(0.3) is identity at inference) + classifier ----
    pooled = jnp.concatenate([x[b * seq:b * seq + 1, :] for b in range(batch)], axis=0)  # (B, H)
    if out_rows > batch:   # pad to a full 8-sublane tile -> single unmasked (8,128) store
        pooled = jnp.concatenate(
            [pooled, jnp.zeros((out_rows - batch, HIDDEN), jnp.float32)], axis=0)
    cls_w = wh_ref[CLS_SLAB][:, 0:LABELS_PAD]                               # (H, 128) bf16
    out_ref[...] = mm(pooled, cls_w) + vec(ROW_CLS_B, LABELS_PAD)           # (out_rows, 128)


# ---------------------------------- parameter init ----------------------------------
def init_params(key):
    def dense(k, fan_in, fan_out):
        return 0.02 * jax.random.normal(k, (fan_in, fan_out), dtype=jnp.float32)

    def bvec(k, n):
        return 0.02 * jax.random.normal(k, (n,), dtype=jnp.float32)

    ks = jax.random.split(key, 8)

    # packed embedding tables: word | pos | type  -> (146, H) f32
    emb_tables = jnp.concatenate(
        [dense(ks[0], VOCAB, HIDDEN), dense(ks[1], MAX_POS, HIDDEN),
         dense(ks[2], TYPE_VOCAB, HIDDEN)], axis=0)

    # packed biases / LayerNorm params -> (VEC_ROWS, 128) f32
    vecs = jnp.zeros((VEC_ROWS, 128), jnp.float32)
    vecs = vecs.at[ROW_EMB_G, :HIDDEN].set(1.0)
    vecs = vecs.at[ROW_EMB_B, :HIDDEN].set(bvec(ks[3], HIDDEN))

    # packed H-input weights (wqkv | wo | wi per layer, classifier in the last slab)
    wh = jnp.zeros((LAYERS + 1, HIDDEN, WH_COLS), jnp.float32)
    wf_list = []
    for l in range(LAYERS):
        base = layer_base(l)
        lk = jax.random.split(ks[4 + l], 12)
        wq = dense(lk[0], HIDDEN, HIDDEN)
        wk = dense(lk[1], HIDDEN, HIDDEN)
        wv = dense(lk[2], HIDDEN, HIDDEN)
        wh = wh.at[l, :, COL_WQKV:COL_WQKV + 3 * HIDDEN].set(
            jnp.concatenate([wq, wk, wv], axis=1))
        wh = wh.at[l, :, COL_WO:COL_WO + HIDDEN].set(dense(lk[3], HIDDEN, HIDDEN))
        wh = wh.at[l, :, COL_WI:COL_WI + INTERMEDIATE].set(dense(lk[4], HIDDEN, INTERMEDIATE))
        wf_list.append(dense(lk[5], INTERMEDIATE, HIDDEN))

        vecs = vecs.at[base + OFF_BQKV, :3 * HIDDEN].set(bvec(lk[6], 3 * HIDDEN))
        vecs = vecs.at[base + OFF_BO, :HIDDEN].set(bvec(lk[7], HIDDEN))
        vecs = vecs.at[base + OFF_LN1G, :HIDDEN].set(1.0)
        vecs = vecs.at[base + OFF_LN1B, :HIDDEN].set(bvec(lk[8], HIDDEN))
        vecs = vecs.at[base + OFF_BI, :INTERMEDIATE].set(bvec(lk[9], INTERMEDIATE))
        vecs = vecs.at[base + OFF_BF, :HIDDEN].set(bvec(lk[10], HIDDEN))
        vecs = vecs.at[base + OFF_LN2G, :HIDDEN].set(1.0)
        vecs = vecs.at[base + OFF_LN2B, :HIDDEN].set(bvec(lk[11], HIDDEN))

    wh = wh.at[CLS_SLAB, :, :LABELS].set(dense(ks[6], HIDDEN, LABELS))   # padded cols stay 0
    vecs = vecs.at[ROW_CLS_B, :LABELS].set(bvec(ks[7], LABELS))

    return {
        "emb_tables": emb_tables,                       # (146, H) f32
        "vecs": vecs,                                   # (19, 128) f32
        "w_h": wh.astype(jnp.bfloat16),                 # (L+1, H, 224) bf16
        "w_f": jnp.stack(wf_list).astype(jnp.bfloat16), # (L, I, H) bf16
    }


# ------------------------------------- forward ---------------------------------------
def bert_class_forward(params, ids, mask, token_type_ids):
    """Mirrors BERTClass.forward: encoder -> hidden_state[:, 0] -> dropout(eval) -> Linear."""
    B, S = ids.shape
    assert S <= MAX_POS

    # pack ids & token_type into one tiny int32 operand; mask goes in as f32 (B, S).
    ints = jnp.stack([ids.reshape(B * S), token_type_ids.reshape(B * S)],
                     axis=-1).astype(jnp.int32)                     # (B*S, 2)
    mask_f = mask.astype(jnp.float32)                               # (B, S)

    out_rows = ((B + 7) // 8) * 8                                   # sublane-padded output rows
    kernel = functools.partial(_bert_kernel, batch=B, seq=S, out_rows=out_rows)

    logits_pad = pl.pallas_call(
        kernel,
        out_shape=jax.ShapeDtypeStruct((out_rows, LABELS_PAD), jnp.float32),
    )(ints, mask_f, params["emb_tables"], params["vecs"], params["w_h"], params["w_f"])

    # self.l2 = Dropout(0.3): identity at inference time.
    return logits_pad[:B, :LABELS]                                  # (B, 90)


# --------------------------------------- main ----------------------------------------
if __name__ == "__main__":
    key = jax.random.PRNGKey(0)
    pkey, ikey = jax.random.split(key)
    params = init_params(pkey)

    B, S = 2, 8
    ids = jax.random.randint(ikey, (B, S), 0, VOCAB, dtype=jnp.int32)
    lengths = jnp.array([8, 6], dtype=jnp.int32)
    mask = (jnp.arange(S)[None, :] < lengths[:, None]).astype(jnp.int32)   # (B, S)
    token_type_ids = jnp.zeros((B, S), dtype=jnp.int32)

    fwd = jax.jit(bert_class_forward)
    logits = jax.block_until_ready(fwd(params, ids, mask, token_type_ids))

    assert logits.shape == (B, LABELS)
    assert bool(jnp.all(jnp.isfinite(logits)))
    print("KERNEL_OK")
</pallas_src>

<mosaic_0001>
module attributes {stable_mosaic.version = 11 : i64} {
  func.func @_bert_kernel(%arg0: memref<16x2xi32, #tpu.memory_space<vmem>>, %arg1: memref<2x8xf32, #tpu.memory_space<vmem>>, %arg2: memref<146x32xf32, #tpu.memory_space<vmem>>, %arg3: memref<19x128xf32, #tpu.memory_space<vmem>>, %arg4: memref<3x32x192xbf16, #tpu.memory_space<vmem>>, %arg5: memref<2x64x32xbf16, #tpu.memory_space<vmem>>, %arg6: memref<8x128xf32, #tpu.memory_space<vmem>>) attributes {dimension_semantics = [], scalar_prefetch = 0 : i64, scratch_operands = 0 : i64, tpu.core_type = #tpu.core_type<tc>} {
    %c0 = arith.constant 0 : index
    %c0_0 = arith.constant 0 : index
    %0 = vector.load %arg0[%c0, %c0_0] : memref<16x2xi32, #tpu.memory_space<vmem>>, vector<16x1xi32>
    %1 = tpu.iota {dimensions = array<i32: 1>} : vector<16x128xi32>
    %2 = vector.broadcast %0 : vector<16x1xi32> to vector<16x128xi32>
    %3 = arith.cmpi eq, %2, %1 : vector<16x128xi32>
    %4 = arith.extui %3 : vector<16x128xi1> to vector<16x128xi32>
    %5 = arith.sitofp %4 : vector<16x128xi32> to vector<16x128xf32>
    %c0_1 = arith.constant 0 : index
    %c0_2 = arith.constant 0 : index
    %6 = vector.load %arg2[%c0_1, %c0_2] : memref<146x32xf32, #tpu.memory_space<vmem>>, vector<128x32xf32>
    %cst = arith.constant dense<0.000000e+00> : vector<16x32xf32>
    %7 = tpu.matmul %5, %6, %cst {dimension_numbers = #tpu.dot_dimension_numbers<[1], [0], [0], [1], [0, 0, 1, 1], [], []>} : vector<16x128xf32>, vector<128x32xf32>, vector<16x32xf32> -> vector<16x32xf32>
    %c128 = arith.constant 128 : index
    %c0_3 = arith.constant 0 : index
    %8 = vector.load %arg2[%c128, %c0_3] : memref<146x32xf32, #tpu.memory_space<vmem>>, vector<8x32xf32>
    %9 = tpu.concatenate %8, %8 in 0 : vector<8x32xf32>, vector<8x32xf32> -> vector<16x32xf32>
    %c0_4 = arith.constant 0 : index
    %c1 = arith.constant 1 : index
    %10 = vector.load %arg0[%c0_4, %c1] : memref<16x2xi32, #tpu.memory_space<vmem>>, vector<16x1xi32>
    %11 = arith.sitofp %10 : vector<16x1xi32> to vector<16x1xf32>
    %c144 = arith.constant 144 : index
    %c0_5 = arith.constant 0 : index
    %12 = vector.load %arg2[%c144, %c0_5] : memref<146x32xf32, #tpu.memory_space<vmem>>, vector<1x32xf32>
    %c145 = arith.constant 145 : index
    %c0_6 = arith.constant 0 : index
    %13 = vector.load %arg2[%c145, %c0_6] : memref<146x32xf32, #tpu.memory_space<vmem>>, vector<1x32xf32>
    %14 = arith.subf %13, %12 : vector<1x32xf32>
    %15 = vector.broadcast %11 : vector<16x1xf32> to vector<16x32xf32>
    %16 = vector.broadcast %14 : vector<1x32xf32> to vector<16x32xf32>
    %17 = arith.mulf %15, %16 : vector<16x32xf32>
    %18 = vector.broadcast %12 : vector<1x32xf32> to vector<16x32xf32>
    %19 = arith.addf %18, %17 : vector<16x32xf32>
    %20 = arith.addf %7, %9 : vector<16x32xf32>
    %21 = arith.addf %20, %19 : vector<16x32xf32>
    %cst_7 = arith.constant dense<0.000000e+00> : vector<16xf32>
    %22 = vector.multi_reduction <add>, %21, %cst_7 [1] : vector<16x32xf32> to vector<16xf32>
    %23 = vector.shape_cast %22 : vector<16xf32> to vector<16x1xf32>
    %cst_8 = arith.constant 3.200000e+01 : f32
    %24 = vector.broadcast %cst_8 : f32 to vector<16x1xf32>
    %25 = arith.divf %23, %24 : vector<16x1xf32>
    %26 = vector.broadcast %25 : vector<16x1xf32> to vector<16x32xf32>
    %27 = arith.subf %21, %26 : vector<16x32xf32>
    %28 = arith.mulf %27, %27 : vector<16x32xf32>
    %cst_9 = arith.constant dense<0.000000e+00> : vector<16xf32>
    %29 = vector.multi_reduction <add>, %28, %cst_9 [1] : vector<16x32xf32> to vector<16xf32>
    %30 = vector.shape_cast %29 : vector<16xf32> to vector<16x1xf32>
    %cst_10 = arith.constant 3.200000e+01 : f32
    %31 = vector.broadcast %cst_10 : f32 to vector<16x1xf32>
    %32 = arith.divf %30, %31 : vector<16x1xf32>
    %33 = vector.broadcast %25 : vector<16x1xf32> to vector<16x32xf32>
    %34 = arith.subf %21, %33 : vector<16x32xf32>
    %cst_11 = arith.constant 9.99999996E-13 : f32
    %35 = vector.broadcast %cst_11 : f32 to vector<16x1xf32>
    %36 = arith.addf %32, %35 : vector<16x1xf32>
    %37 = math.rsqrt %36 : vector<16x1xf32>
    %38 = vector.broadcast %37 : vector<16x1xf32> to vector<16x32xf32>
    %39 = arith.mulf %34, %38 : vector<16x32xf32>
    %c0_12 = arith.constant 0 : index
    %c0_13 = arith.constant 0 : index
    %40 = vector.load %arg3[%c0_12, %c0_13] : memref<19x128xf32, #tpu.memory_space<vmem>>, vector<1x32xf32>
    %41 = vector.broadcast %40 : vector<1x32xf32> to vector<16x32xf32>
    %42 = arith.mulf %39, %41 : vector<16x32xf32>
    %c1_14 = arith.constant 1 : index
    %c0_15 = arith.constant 0 : index
    %43 = vector.load %arg3[%c1_14, %c0_15] : memref<19x128xf32, #tpu.memory_space<vmem>>, vector<1x32xf32>
    %44 = vector.broadcast %43 : vector<1x32xf32> to vector<16x32xf32>
    %45 = arith.addf %42, %44 : vector<16x32xf32>
    %c0_16 = arith.constant 0 : index
    %c0_17 = arith.constant 0 : index
    %46 = vector.load %arg1[%c0_16, %c0_17] : memref<2x8xf32, #tpu.memory_space<vmem>>, vector<2x8xf32>
    %cst_18 = arith.constant 1.000000e+00 : f32
    %47 = vector.broadcast %cst_18 : f32 to vector<2x8xf32>
    %48 = arith.subf %47, %46 : vector<2x8xf32>
    %cst_19 = arith.constant -1.000000e+04 : f32
    %49 = vector.broadcast %cst_19 : f32 to vector<2x8xf32>
    %50 = arith.mulf %48, %49 : vector<2x8xf32>
    %51 = vector.shape_cast %50 : vector<2x8xf32> to vector<2x1x8xf32>
    %52 = vector.shape_cast %51 : vector<2x1x8xf32> to vector<2x1x8xf32>
    %53 = vector.broadcast %52 : vector<2x1x8xf32> to vector<2x8x8xf32>
    %c0_20 = arith.constant 0 : index
    %c0_21 = arith.constant 0 : index
    %c0_22 = arith.constant 0 : index
    %54 = vector.load %arg4[%c0_20, %c0_21, %c0_22] : memref<3x32x192xbf16, #tpu.memory_space<vmem>>, vector<1x32x192xbf16>
    %55 = vector.shape_cast %54 : vector<1x32x192xbf16> to vector<32x192xbf16>
    %56 = vector.extract_strided_slice %55 {offsets = [0, 0], sizes = [32, 96], strides = [1, 1]} : vector<32x192xbf16> to vector<32x96xbf16>
    %57 = vector.extract_strided_slice %55 {offsets = [0, 96], sizes = [32, 32], strides = [1, 1]} : vector<32x192xbf16> to vector<32x32xbf16>
    %58 = vector.extract_strided_slice %55 {offsets = [0, 128], sizes = [32, 64], strides = [1, 1]} : vector<32x192xbf16> to vector<32x64xbf16>
    %c0_23 = arith.constant 0 : index
    %c0_24 = arith.constant 0 : index
    %c0_25 = arith.constant 0 : index
    %59 = vector.load %arg5[%c0_23, %c0_24, %c0_25] : memref<2x64x32xbf16, #tpu.memory_space<vmem>>, vector<1x64x32xbf16>
    %60 = vector.shape_cast %59 : vector<1x64x32xbf16> to vector<64x32xbf16>
    %61 = arith.truncf %45 : vector<16x32xf32> to vector<16x32xbf16>
    %cst_26 = arith.constant dense<0.000000e+00> : vector<16x96xf32>
    %62 = tpu.matmul %61, %56, %cst_26 {dimension_numbers = #tpu.dot_dimension_numbers<[1], [0], [0], [1], [0, 0, 1, 1], [], []>} : vector<16x32xbf16>, vector<32x96xbf16>, vector<16x96xf32> -> vector<16x96xf32>
    %c2 = arith.constant 2 : index
    %c0_27 = arith.constant 0 : index
    %63 = vector.load %arg3[%c2, %c0_27] : memref<19x128xf32, #tpu.memory_space<vmem>>, vector<1x96xf32>
    %64 = vector.broadcast %63 : vector<1x96xf32> to vector<16x96xf32>
    %65 = arith.addf %62, %64 : vector<16x96xf32>
    %66 = vector.shape_cast %65 : vector<16x96xf32> to vector<2x8x96xf32>
    %67 = vector.extract_strided_slice %66 {offsets = [0, 0, 0], sizes = [2, 8, 16], strides = [1, 1, 1]} : vector<2x8x96xf32> to vector<2x8x16xf32>
    %68 = arith.truncf %67 : vector<2x8x16xf32> to vector<2x8x16xbf16>
    %69 = vector.extract_strided_slice %66 {offsets = [0, 0, 32], sizes = [2, 8, 16], strides = [1, 1, 1]} : vector<2x8x96xf32> to vector<2x8x16xf32>
    %70 = arith.truncf %69 : vector<2x8x16xf32> to vector<2x8x16xbf16>
    %71 = vector.extract_strided_slice %66 {offsets = [0, 0, 64], sizes = [2, 8, 16], strides = [1, 1, 1]} : vector<2x8x96xf32> to vector<2x8x16xf32>
    %72 = arith.truncf %71 : vector<2x8x16xf32> to vector<2x8x16xbf16>
    "tpu.trace_start"() <{level = 10 : i32, message = "bqd,bkd->bqk"}> : () -> ()
    %cst_28 = arith.constant dense<0.000000e+00> : vector<2x8x8xf32>
    %73 = tpu.matmul %68, %70, %cst_28 {dimension_numbers = #tpu.dot_dimension_numbers<[2], [2], [1], [1], [0, 0, 0, 1, 1, 1], [0], [0]>} : vector<2x8x16xbf16>, vector<2x8x16xbf16>, vector<2x8x8xf32> -> vector<2x8x8xf32>
    "tpu.trace_stop"() : () -> ()
    %cst_29 = arith.constant 2.500000e-01 : f32
    %74 = vector.broadcast %cst_29 : f32 to vector<2x8x8xf32>
    %75 = arith.mulf %73, %74 : vector<2x8x8xf32>
    %76 = arith.addf %75, %53 : vector<2x8x8xf32>
    %cst_30 = arith.constant dense<0xFF800000> : vector<2x8xf32>
    %77 = vector.multi_reduction <maximumf>, %76, %cst_30 [2] : vector<2x8x8xf32> to vector<2x8xf32>
    %78 = vector.shape_cast %77 : vector<2x8xf32> to vector<2x8x1xf32>
    %79 = vector.broadcast %78 : vector<2x8x1xf32> to vector<2x8x8xf32>
    %80 = arith.subf %76, %79 : vector<2x8x8xf32>
    %81 = math.exp %80 : vector<2x8x8xf32>
    %cst_31 = arith.constant dense<0.000000e+00> : vector<2x8xf32>
    %82 = vector.multi_reduction <add>, %81, %cst_31 [2] : vector<2x8x8xf32> to vector<2x8xf32>
    %83 = vector.shape_cast %82 : vector<2x8xf32> to vector<2x8x1xf32>
    %84 = tpu.reciprocal %83 {approx = true} : vector<2x8x1xf32> -> vector<2x8x1xf32>
    %85 = vector.broadcast %84 : vector<2x8x1xf32> to vector<2x8x8xf32>
    %86 = arith.mulf %81, %85 : vector<2x8x8xf32>
    %87 = arith.truncf %86 : vector<2x8x8xf32> to vector<2x8x8xbf16>
    "tpu.trace_start"() <{level = 10 : i32, message = "bqk,bkd->bqd"}> : () -> ()
    %cst_32 = arith.constant dense<0.000000e+00> : vector<2x8x16xf32>
    %88 = tpu.matmul %87, %72, %cst_32 {dimension_numbers = #tpu.dot_dimension_numbers<[2], [1], [1], [2], [0, 0, 0, 1, 1, 2], [0], [0]>} : vector<2x8x8xbf16>, vector<2x8x16xbf16>, vector<2x8x16xf32> -> vector<2x8x16xf32>
    "tpu.trace_stop"() : () -> ()
    %89 = vector.extract_strided_slice %66 {offsets = [0, 0, 16], sizes = [2, 8, 16], strides = [1, 1, 1]} : vector<2x8x96xf32> to vector<2x8x16xf32>
    %90 = arith.truncf %89 : vector<2x8x16xf32> to vector<2x8x16xbf16>
    %91 = vector.extract_strided_slice %66 {offsets = [0, 0, 48], sizes = [2, 8, 16], strides = [1, 1, 1]} : vector<2x8x96xf32> to vector<2x8x16xf32>
    %92 = arith.truncf %91 : vector<2x8x16xf32> to vector<2x8x16xbf16>
    %93 = vector.extract_strided_slice %66 {offsets = [0, 0, 80], sizes = [2, 8, 16], strides = [1, 1, 1]} : vector<2x8x96xf32> to vector<2x8x16xf32>
    %94 = arith.truncf %93 : vector<2x8x16xf32> to vector<2x8x16xbf16>
    "tpu.trace_start"() <{level = 10 : i32, message = "bqd,bkd->bqk"}> : () -> ()
    %cst_33 = arith.constant dense<0.000000e+00> : vector<2x8x8xf32>
    %95 = tpu.matmul %90, %92, %cst_33 {dimension_numbers = #tpu.dot_dimension_numbers<[2], [2], [1], [1], [0, 0, 0, 1, 1, 1], [0], [0]>} : vector<2x8x16xbf16>, vector<2x8x16xbf16>, vector<2x8x8xf32> -> vector<2x8x8xf32>
    "tpu.trace_stop"() : () -> ()
    %cst_34 = arith.constant 2.500000e-01 : f32
    %96 = vector.broadcast %cst_34 : f32 to vector<2x8x8xf32>
    %97 = arith.mulf %95, %96 : vector<2x8x8xf32>
    %98 = arith.addf %97, %53 : vector<2x8x8xf32>
    %cst_35 = arith.constant dense<0xFF800000> : vector<2x8xf32>
    %99 = vector.multi_reduction <maximumf>, %98, %cst_35 [2] : vector<2x8x8xf32> to vector<2x8xf32>
    %100 = vector.shape_cast %99 : vector<2x8xf32> to vector<2x8x1xf32>
    %101 = vector.broadcast %100 : vector<2x8x1xf32> to vector<2x8x8xf32>
    %102 = arith.subf %98, %101 : vector<2x8x8xf32>
    %103 = math.exp %102 : vector<2x8x8xf32>
    %cst_36 = arith.constant dense<0.000000e+00> : vector<2x8xf32>
    %104 = vector.multi_reduction <add>, %103, %cst_36 [2] : vector<2x8x8xf32> to vector<2x8xf32>
    %105 = vector.shape_cast %104 : vector<2x8xf32> to vector<2x8x1xf32>
    %106 = tpu.reciprocal %105 {approx = true} : vector<2x8x1xf32> -> vector<2x8x1xf32>
    %107 = vector.broadcast %106 : vector<2x8x1xf32> to vector<2x8x8xf32>
    %108 = arith.mulf %103, %107 : vector<2x8x8xf32>
    %109 = arith.truncf %108 : vector<2x8x8xf32> to vector<2x8x8xbf16>
    "tpu.trace_start"() <{level = 10 : i32, message = "bqk,bkd->bqd"}> : () -> ()
    %cst_37 = arith.constant dense<0.000000e+00> : vector<2x8x16xf32>
    %110 = tpu.matmul %109, %94, %cst_37 {dimension_numbers = #tpu.dot_dimension_numbers<[2], [1], [1], [2], [0, 0, 0, 1, 1, 2], [0], [0]>} : vector<2x8x8xbf16>, vector<2x8x16xbf16>, vector<2x8x16xf32> -> vector<2x8x16xf32>
    "tpu.trace_stop"() : () -> ()
    %111 = tpu.concatenate %88, %110 in 2 : vector<2x8x16xf32>, vector<2x8x16xf32> -> vector<2x8x32xf32>
    %112 = vector.shape_cast %111 : vector<2x8x32xf32> to vector<16x32xf32>
    %113 = arith.truncf %112 : vector<16x32xf32> to vector<16x32xbf16>
    %cst_38 = arith.constant dense<0.000000e+00> : vector<16x32xf32>
    %114 = tpu.matmul %113, %57, %cst_38 {dimension_numbers = #tpu.dot_dimension_numbers<[1], [0], [0], [1], [0, 0, 1, 1], [], []>} : vector<16x32xbf16>, vector<32x32xbf16>, vector<16x32xf32> -> vector<16x32xf32>
    %c3 = arith.constant 3 : index
    %c0_39 = arith.constant 0 : index
    %115 = vector.load %arg3[%c3, %c0_39] : memref<19x128xf32, #tpu.memory_space<vmem>>, vector<1x32xf32>
    %116 = vector.broadcast %115 : vector<1x32xf32> to vector<16x32xf32>
    %117 = arith.addf %114, %116 : vector<16x32xf32>
    %118 = arith.addf %117, %45 : vector<16x32xf32>
    %cst_40 = arith.constant dense<0.000000e+00> : vector<16xf32>
    %119 = vector.multi_reduction <add>, %118, %cst_40 [1] : vector<16x32xf32> to vector<16xf32>
    %120 = vector.shape_cast %119 : vector<16xf32> to vector<16x1xf32>
    %cst_41 = arith.constant 3.200000e+01 : f32
    %121 = vector.broadcast %cst_41 : f32 to vector<16x1xf32>
    %122 = arith.divf %120, %121 : vector<16x1xf32>
    %123 = vector.broadcast %122 : vector<16x1xf32> to vector<16x32xf32>
    %124 = arith.subf %118, %123 : vector<16x32xf32>
    %125 = arith.mulf %124, %124 : vector<16x32xf32>
    %cst_42 = arith.constant dense<0.000000e+00> : vector<16xf32>
    %126 = vector.multi_reduction <add>, %125, %cst_42 [1] : vector<16x32xf32> to vector<16xf32>
    %127 = vector.shape_cast %126 : vector<16xf32> to vector<16x1xf32>
    %cst_43 = arith.constant 3.200000e+01 : f32
    %128 = vector.broadcast %cst_43 : f32 to vector<16x1xf32>
    %129 = arith.divf %127, %128 : vector<16x1xf32>
    %130 = vector.broadcast %122 : vector<16x1xf32> to vector<16x32xf32>
    %131 = arith.subf %118, %130 : vector<16x32xf32>
    %cst_44 = arith.constant 9.99999996E-13 : f32
    %132 = vector.broadcast %cst_44 : f32 to vector<16x1xf32>
    %133 = arith.addf %129, %132 : vector<16x1xf32>
    %134 = math.rsqrt %133 : vector<16x1xf32>
    %135 = vector.broadcast %134 : vector<16x1xf32> to vector<16x32xf32>
    %136 = arith.mulf %131, %135 : vector<16x32xf32>
    %c4 = arith.constant 4 : index
    %c0_45 = arith.constant 0 : index
    %137 = vector.load %arg3[%c4, %c0_45] : memref<19x128xf32, #tpu.memory_space<vmem>>, vector<1x32xf32>
    %138 = vector.broadcast %137 : vector<1x32xf32> to vector<16x32xf32>
    %139 = arith.mulf %136, %138 : vector<16x32xf32>
    %c5 = arith.constant 5 : index
    %c0_46 = arith.constant 0 : index
    %140 = vector.load %arg3[%c5, %c0_46] : memref<19x128xf32, #tpu.memory_space<vmem>>, vector<1x32xf32>
    %141 = vector.broadcast %140 : vector<1x32xf32> to vector<16x32xf32>
    %142 = arith.addf %139, %141 : vector<16x32xf32>
    %143 = arith.truncf %142 : vector<16x32xf32> to vector<16x32xbf16>
    %cst_47 = arith.constant dense<0.000000e+00> : vector<16x64xf32>
    %144 = tpu.matmul %143, %58, %cst_47 {dimension_numbers = #tpu.dot_dimension_numbers<[1], [0], [0], [1], [0, 0, 1, 1], [], []>} : vector<16x32xbf16>, vector<32x64xbf16>, vector<16x64xf32> -> vector<16x64xf32>
    %c6 = arith.constant 6 : index
    %c0_48 = arith.constant 0 : index
    %145 = vector.load %arg3[%c6, %c0_48] : memref<19x128xf32, #tpu.memory_space<vmem>>, vector<1x64xf32>
    %146 = vector.broadcast %145 : vector<1x64xf32> to vector<16x64xf32>
    %147 = arith.addf %144, %146 : vector<16x64xf32>
    %cst_49 = arith.constant 5.000000e-01 : f32
    %148 = vector.broadcast %cst_49 : f32 to vector<16x64xf32>
    %149 = arith.mulf %148, %147 : vector<16x64xf32>
    %cst_50 = arith.constant 0.707106769 : f32
    %150 = vector.broadcast %cst_50 : f32 to vector<16x64xf32>
    %151 = arith.mulf %147, %150 : vector<16x64xf32>
    %152 = math.absf %151 : vector<16x64xf32>
    %cst_51 = arith.constant 0.327591091 : f32
    %153 = vector.broadcast %cst_51 : f32 to vector<16x64xf32>
    %154 = arith.mulf %153, %152 : vector<16x64xf32>
    %cst_52 = arith.constant 1.000000e+00 : f32
    %155 = vector.broadcast %cst_52 : f32 to vector<16x64xf32>
    %156 = arith.addf %155, %154 : vector<16x64xf32>
    %cst_53 = arith.constant 1.000000e+00 : f32
    %157 = vector.broadcast %cst_53 : f32 to vector<16x64xf32>
    %158 = arith.divf %157, %156 : vector<16x64xf32>
    %cst_54 = arith.constant 1.06140542 : f32
    %159 = vector.broadcast %cst_54 : f32 to vector<16x64xf32>
    %160 = arith.mulf %159, %158 : vector<16x64xf32>
    %cst_55 = arith.constant -1.45315206 : f32
    %161 = vector.broadcast %cst_55 : f32 to vector<16x64xf32>
    %162 = arith.addf %160, %161 : vector<16x64xf32>
    %163 = arith.mulf %162, %158 : vector<16x64xf32>
    %cst_56 = arith.constant 1.42141378 : f32
    %164 = vector.broadcast %cst_56 : f32 to vector<16x64xf32>
    %165 = arith.addf %163, %164 : vector<16x64xf32>
    %166 = arith.mulf %165, %158 : vector<16x64xf32>
    %cst_57 = arith.constant -0.284496725 : f32
    %167 = vector.broadcast %cst_57 : f32 to vector<16x64xf32>
    %168 = arith.addf %166, %167 : vector<16x64xf32>
    %169 = arith.mulf %168, %158 : vector<16x64xf32>
    %cst_58 = arith.constant 0.254829586 : f32
    %170 = vector.broadcast %cst_58 : f32 to vector<16x64xf32>
    %171 = arith.addf %169, %170 : vector<16x64xf32>
    %172 = arith.mulf %171, %158 : vector<16x64xf32>
    %cst_59 = arith.constant 0.000000e+00 : f32
    %173 = vector.broadcast %cst_59 : f32 to vector<16x64xf32>
    %174 = arith.subf %173, %152 : vector<16x64xf32>
    %175 = arith.mulf %174, %152 : vector<16x64xf32>
    %176 = math.exp %175 : vector<16x64xf32>
    %177 = arith.mulf %172, %176 : vector<16x64xf32>
    %cst_60 = arith.constant 1.000000e+00 : f32
    %178 = vector.broadcast %cst_60 : f32 to vector<16x64xf32>
    %179 = arith.subf %178, %177 : vector<16x64xf32>
    %cst_61 = arith.constant 0.000000e+00 : f32
    %180 = vector.broadcast %cst_61 : f32 to vector<16x64xf32>
    %181 = arith.cmpf oge, %151, %180 : vector<16x64xf32>
    %cst_62 = arith.constant 0.000000e+00 : f32
    %182 = vector.broadcast %cst_62 : f32 to vector<16x64xf32>
    %183 = arith.subf %182, %179 : vector<16x64xf32>
    %184 = arith.select %181, %179, %183 : vector<16x64xi1>, vector<16x64xf32>
    %cst_63 = arith.constant 1.000000e+00 : f32
    %185 = vector.broadcast %cst_63 : f32 to vector<16x64xf32>
    %186 = arith.addf %185, %184 : vector<16x64xf32>
    %187 = arith.mulf %149, %186 : vector<16x64xf32>
    %188 = arith.truncf %187 : vector<16x64xf32> to vector<16x64xbf16>
    %cst_64 = arith.constant dense<0.000000e+00> : vector<16x32xf32>
    %189 = tpu.matmul %188, %60, %cst_64 {dimension_numbers = #tpu.dot_dimension_numbers<[1], [0], [0], [1], [0, 0, 1, 1], [], []>} : vector<16x64xbf16>, vector<64x32xbf16>, vector<16x32xf32> -> vector<16x32xf32>
    %c7 = arith.constant 7 : index
    %c0_65 = arith.constant 0 : index
    %190 = vector.load %arg3[%c7, %c0_65] : memref<19x128xf32, #tpu.memory_space<vmem>>, vector<1x32xf32>
    %191 = vector.broadcast %190 : vector<1x32xf32> to vector<16x32xf32>
    %192 = arith.addf %189, %191 : vector<16x32xf32>
    %193 = arith.addf %192, %142 : vector<16x32xf32>
    %cst_66 = arith.constant dense<0.000000e+00> : vector<16xf32>
    %194 = vector.multi_reduction <add>, %193, %cst_66 [1] : vector<16x32xf32> to vector<16xf32>
    %195 = vector.shape_cast %194 : vector<16xf32> to vector<16x1xf32>
    %cst_67 = arith.constant 3.200000e+01 : f32
    %196 = vector.broadcast %cst_67 : f32 to vector<16x1xf32>
    %197 = arith.divf %195, %196 : vector<16x1xf32>
    %198 = vector.broadcast %197 : vector<16x1xf32> to vector<16x32xf32>
    %199 = arith.subf %193, %198 : vector<16x32xf32>
    %200 = arith.mulf %199, %199 : vector<16x32xf32>
    %cst_68 = arith.constant dense<0.000000e+00> : vector<16xf32>
    %201 = vector.multi_reduction <add>, %200, %cst_68 [1] : vector<16x32xf32> to vector<16xf32>
    %202 = vector.shape_cast %201 : vector<16xf32> to vector<16x1xf32>
    %cst_69 = arith.constant 3.200000e+01 : f32
    %203 = vector.broadcast %cst_69 : f32 to vector<16x1xf32>
    %204 = arith.divf %202, %203 : vector<16x1xf32>
    %205 = vector.broadcast %197 : vector<16x1xf32> to vector<16x32xf32>
    %206 = arith.subf %193, %205 : vector<16x32xf32>
    %cst_70 = arith.constant 9.99999996E-13 : f32
    %207 = vector.broadcast %cst_70 : f32 to vector<16x1xf32>
    %208 = arith.addf %204, %207 : vector<16x1xf32>
    %209 = math.rsqrt %208 : vector<16x1xf32>
    %210 = vector.broadcast %209 : vector<16x1xf32> to vector<16x32xf32>
    %211 = arith.mulf %206, %210 : vector<16x32xf32>
    %c8 = arith.constant 8 : index
    %c0_71 = arith.constant 0 : index
    %212 = vector.load %arg3[%c8, %c0_71] : memref<19x128xf32, #tpu.memory_space<vmem>>, vector<1x32xf32>
    %213 = vector.broadcast %212 : vector<1x32xf32> to vector<16x32xf32>
    %214 = arith.mulf %211, %213 : vector<16x32xf32>
    %c9 = arith.constant 9 : index
    %c0_72 = arith.constant 0 : index
    %215 = vector.load %arg3[%c9, %c0_72] : memref<19x128xf32, #tpu.memory_space<vmem>>, vector<1x32xf32>
    %216 = vector.broadcast %215 : vector<1x32xf32> to vector<16x32xf32>
    %217 = arith.addf %214, %216 : vector<16x32xf32>
    %c1_73 = arith.constant 1 : index
    %c0_74 = arith.constant 0 : index
    %c0_75 = arith.constant 0 : index
    %218 = vector.load %arg4[%c1_73, %c0_74, %c0_75] : memref<3x32x192xbf16, #tpu.memory_space<vmem>>, vector<1x32x192xbf16>
    %219 = vector.shape_cast %218 : vector<1x32x192xbf16> to vector<32x192xbf16>
    %220 = vector.extract_strided_slice %219 {offsets = [0, 0], sizes = [32, 96], strides = [1, 1]} : vector<32x192xbf16> to vector<32x96xbf16>
    %221 = vector.extract_strided_slice %219 {offsets = [0, 96], sizes = [32, 32], strides = [1, 1]} : vector<32x192xbf16> to vector<32x32xbf16>
    %222 = vector.extract_strided_slice %219 {offsets = [0, 128], sizes = [32, 64], strides = [1, 1]} : vector<32x192xbf16> to vector<32x64xbf16>
    %c1_76 = arith.constant 1 : index
    %c0_77 = arith.constant 0 : index
    %c0_78 = arith.constant 0 : index
    %223 = vector.load %arg5[%c1_76, %c0_77, %c0_78] : memref<2x64x32xbf16, #tpu.memory_space<vmem>>, vector<1x64x32xbf16>
    %224 = vector.shape_cast %223 : vector<1x64x32xbf16> to vector<64x32xbf16>
    %225 = arith.truncf %217 : vector<16x32xf32> to vector<16x32xbf16>
    %cst_79 = arith.constant dense<0.000000e+00> : vector<16x96xf32>
    %226 = tpu.matmul %225, %220, %cst_79 {dimension_numbers = #tpu.dot_dimension_numbers<[1], [0], [0], [1], [0, 0, 1, 1], [], []>} : vector<16x32xbf16>, vector<32x96xbf16>, vector<16x96xf32> -> vector<16x96xf32>
    %c10 = arith.constant 10 : index
    %c0_80 = arith.constant 0 : index
    %227 = vector.load %arg3[%c10, %c0_80] : memref<19x128xf32, #tpu.memory_space<vmem>>, vector<1x96xf32>
    %228 = vector.broadcast %227 : vector<1x96xf32> to vector<16x96xf32>
    %229 = arith.addf %226, %228 : vector<16x96xf32>
    %230 = vector.shape_cast %229 : vector<16x96xf32> to vector<2x8x96xf32>
    %231 = vector.extract_strided_slice %230 {offsets = [0, 0, 0], sizes = [2, 8, 16], strides = [1, 1, 1]} : vector<2x8x96xf32> to vector<2x8x16xf32>
    %232 = arith.truncf %231 : vector<2x8x16xf32> to vector<2x8x16xbf16>
    %233 = vector.extract_strided_slice %230 {offsets = [0, 0, 32], sizes = [2, 8, 16], strides = [1, 1, 1]} : vector<2x8x96xf32> to vector<2x8x16xf32>
    %234 = arith.truncf %233 : vector<2x8x16xf32> to vector<2x8x16xbf16>
    %235 = vector.extract_strided_slice %230 {offsets = [0, 0, 64], sizes = [2, 8, 16], strides = [1, 1, 1]} : vector<2x8x96xf32> to vector<2x8x16xf32>
    %236 = arith.truncf %235 : vector<2x8x16xf32> to vector<2x8x16xbf16>
    "tpu.trace_start"() <{level = 10 : i32, message = "bqd,bkd->bqk"}> : () -> ()
    %cst_81 = arith.constant dense<0.000000e+00> : vector<2x8x8xf32>
    %237 = tpu.matmul %232, %234, %cst_81 {dimension_numbers = #tpu.dot_dimension_numbers<[2], [2], [1], [1], [0, 0, 0, 1, 1, 1], [0], [0]>} : vector<2x8x16xbf16>, vector<2x8x16xbf16>, vector<2x8x8xf32> -> vector<2x8x8xf32>
    "tpu.trace_stop"() : () -> ()
    %cst_82 = arith.constant 2.500000e-01 : f32
    %238 = vector.broadcast %cst_82 : f32 to vector<2x8x8xf32>
    %239 = arith.mulf %237, %238 : vector<2x8x8xf32>
    %240 = arith.addf %239, %53 : vector<2x8x8xf32>
    %cst_83 = arith.constant dense<0xFF800000> : vector<2x8xf32>
    %241 = vector.multi_reduction <maximumf>, %240, %cst_83 [2] : vector<2x8x8xf32> to vector<2x8xf32>
    %242 = vector.shape_cast %241 : vector<2x8xf32> to vector<2x8x1xf32>
    %243 = vector.broadcast %242 : vector<2x8x1xf32> to vector<2x8x8xf32>
    %244 = arith.subf %240, %243 : vector<2x8x8xf32>
    %245 = math.exp %244 : vector<2x8x8xf32>
    %cst_84 = arith.constant dense<0.000000e+00> : vector<2x8xf32>
    %246 = vector.multi_reduction <add>, %245, %cst_84 [2] : vector<2x8x8xf32> to vector<2x8xf32>
    %247 = vector.shape_cast %246 : vector<2x8xf32> to vector<2x8x1xf32>
    %248 = tpu.reciprocal %247 {approx = true} : vector<2x8x1xf32> -> vector<2x8x1xf32>
    %249 = vector.broadcast %248 : vector<2x8x1xf32> to vector<2x8x8xf32>
    %250 = arith.mulf %245, %249 : vector<2x8x8xf32>
    %251 = arith.truncf %250 : vector<2x8x8xf32> to vector<2x8x8xbf16>
    "tpu.trace_start"() <{level = 10 : i32, message = "bqk,bkd->bqd"}> : () -> ()
    %cst_85 = arith.constant dense<0.000000e+00> : vector<2x8x16xf32>
    %252 = tpu.matmul %251, %236, %cst_85 {dimension_numbers = #tpu.dot_dimension_numbers<[2], [1], [1], [2], [0, 0, 0, 1, 1, 2], [0], [0]>} : vector<2x8x8xbf16>, vector<2x8x16xbf16>, vector<2x8x16xf32> -> vector<2x8x16xf32>
    "tpu.trace_stop"() : () -> ()
    %253 = vector.extract_strided_slice %230 {offsets = [0, 0, 16], sizes = [2, 8, 16], strides = [1, 1, 1]} : vector<2x8x96xf32> to vector<2x8x16xf32>
    %254 = arith.truncf %253 : vector<2x8x16xf32> to vector<2x8x16xbf16>
    %255 = vector.extract_strided_slice %230 {offsets = [0, 0, 48], sizes = [2, 8, 16], strides = [1, 1, 1]} : vector<2x8x96xf32> to vector<2x8x16xf32>
    %256 = arith.truncf %255 : vector<2x8x16xf32> to vector<2x8x16xbf16>
    %257 = vector.extract_strided_slice %230 {offsets = [0, 0, 80], sizes = [2, 8, 16], strides = [1, 1, 1]} : vector<2x8x96xf32> to vector<2x8x16xf32>
    %258 = arith.truncf %257 : vector<2x8x16xf32> to vector<2x8x16xbf16>
    "tpu.trace_start"() <{level = 10 : i32, message = "bqd,bkd->bqk"}> : () -> ()
    %cst_86 = arith.constant dense<0.000000e+00> : vector<2x8x8xf32>
    %259 = tpu.matmul %254, %256, %cst_86 {dimension_numbers = #tpu.dot_dimension_numbers<[2], [2], [1], [1], [0, 0, 0, 1, 1, 1], [0], [0]>} : vector<2x8x16xbf16>, vector<2x8x16xbf16>, vector<2x8x8xf32> -> vector<2x8x8xf32>
    "tpu.trace_stop"() : () -> ()
    %cst_87 = arith.constant 2.500000e-01 : f32
    %260 = vector.broadcast %cst_87 : f32 to vector<2x8x8xf32>
    %261 = arith.mulf %259, %260 : vector<2x8x8xf32>
    %262 = arith.addf %261, %53 : vector<2x8x8xf32>
    %cst_88 = arith.constant dense<0xFF800000> : vector<2x8xf32>
    %263 = vector.multi_reduction <maximumf>, %262, %cst_88 [2] : vector<2x8x8xf32> to vector<2x8xf32>
    %264 = vector.shape_cast %263 : vector<2x8xf32> to vector<2x8x1xf32>
    %265 = vector.broadcast %264 : vector<2x8x1xf32> to vector<2x8x8xf32>
    %266 = arith.subf %262, %265 : vector<2x8x8xf32>
    %267 = math.exp %266 : vector<2x8x8xf32>
    %cst_89 = arith.constant dense<0.000000e+00> : vector<2x8xf32>
    %268 = vector.multi_reduction <add>, %267, %cst_89 [2] : vector<2x8x8xf32> to vector<2x8xf32>
    %269 = vector.shape_cast %268 : vector<2x8xf32> to vector<2x8x1xf32>
    %270 = tpu.reciprocal %269 {approx = true} : vector<2x8x1xf32> -> vector<2x8x1xf32>
    %271 = vector.broadcast %270 : vector<2x8x1xf32> to vector<2x8x8xf32>
    %272 = arith.mulf %267, %271 : vector<2x8x8xf32>
    %273 = arith.truncf %272 : vector<2x8x8xf32> to vector<2x8x8xbf16>
    "tpu.trace_start"() <{level = 10 : i32, message = "bqk,bkd->bqd"}> : () -> ()
    %cst_90 = arith.constant dense<0.000000e+00> : vector<2x8x16xf32>
    %274 = tpu.matmul %273, %258, %cst_90 {dimension_numbers = #tpu.dot_dimension_numbers<[2], [1], [1], [2], [0, 0, 0, 1, 1, 2], [0], [0]>} : vector<2x8x8xbf16>, vector<2x8x16xbf16>, vector<2x8x16xf32> -> vector<2x8x16xf32>
    "tpu.trace_stop"() : () -> ()
    %275 = tpu.concatenate %252, %274 in 2 : vector<2x8x16xf32>, vector<2x8x16xf32> -> vector<2x8x32xf32>
    %276 = vector.shape_cast %275 : vector<2x8x32xf32> to vector<16x32xf32>
    %277 = arith.truncf %276 : vector<16x32xf32> to vector<16x32xbf16>
    %cst_91 = arith.constant dense<0.000000e+00> : vector<16x32xf32>
    %278 = tpu.matmul %277, %221, %cst_91 {dimension_numbers = #tpu.dot_dimension_numbers<[1], [0], [0], [1], [0, 0, 1, 1], [], []>} : vector<16x32xbf16>, vector<32x32xbf16>, vector<16x32xf32> -> vector<16x32xf32>
    %c11 = arith.constant 11 : index
    %c0_92 = arith.constant 0 : index
    %279 = vector.load %arg3[%c11, %c0_92] : memref<19x128xf32, #tpu.memory_space<vmem>>, vector<1x32xf32>
    %280 = vector.broadcast %279 : vector<1x32xf32> to vector<16x32xf32>
    %281 = arith.addf %278, %280 : vector<16x32xf32>
    %282 = arith.addf %281, %217 : vector<16x32xf32>
    %cst_93 = arith.constant dense<0.000000e+00> : vector<16xf32>
    %283 = vector.multi_reduction <add>, %282, %cst_93 [1] : vector<16x32xf32> to vector<16xf32>
    %284 = vector.shape_cast %283 : vector<16xf32> to vector<16x1xf32>
    %cst_94 = arith.constant 3.200000e+01 : f32
    %285 = vector.broadcast %cst_94 : f32 to vector<16x1xf32>
    %286 = arith.divf %284, %285 : vector<16x1xf32>
    %287 = vector.broadcast %286 : vector<16x1xf32> to vector<16x32xf32>
    %288 = arith.subf %282, %287 : vector<16x32xf32>
    %289 = arith.mulf %288, %288 : vector<16x32xf32>
    %cst_95 = arith.constant dense<0.000000e+00> : vector<16xf32>
    %290 = vector.multi_reduction <add>, %289, %cst_95 [1] : vector<16x32xf32> to vector<16xf32>
    %291 = vector.shape_cast %290 : vector<16xf32> to vector<16x1xf32>
    %cst_96 = arith.constant 3.200000e+01 : f32
    %292 = vector.broadcast %cst_96 : f32 to vector<16x1xf32>
    %293 = arith.divf %291, %292 : vector<16x1xf32>
    %294 = vector.broadcast %286 : vector<16x1xf32> to vector<16x32xf32>
    %295 = arith.subf %282, %294 : vector<16x32xf32>
    %cst_97 = arith.constant 9.99999996E-13 : f32
    %296 = vector.broadcast %cst_97 : f32 to vector<16x1xf32>
    %297 = arith.addf %293, %296 : vector<16x1xf32>
    %298 = math.rsqrt %297 : vector<16x1xf32>
    %299 = vector.broadcast %298 : vector<16x1xf32> to vector<16x32xf32>
    %300 = arith.mulf %295, %299 : vector<16x32xf32>
    %c12 = arith.constant 12 : index
    %c0_98 = arith.constant 0 : index
    %301 = vector.load %arg3[%c12, %c0_98] : memref<19x128xf32, #tpu.memory_space<vmem>>, vector<1x32xf32>
    %302 = vector.broadcast %301 : vector<1x32xf32> to vector<16x32xf32>
    %303 = arith.mulf %300, %302 : vector<16x32xf32>
    %c13 = arith.constant 13 : index
    %c0_99 = arith.constant 0 : index
    %304 = vector.load %arg3[%c13, %c0_99] : memref<19x128xf32, #tpu.memory_space<vmem>>, vector<1x32xf32>
    %305 = vector.broadcast %304 : vector<1x32xf32> to vector<16x32xf32>
    %306 = arith.addf %303, %305 : vector<16x32xf32>
    %307 = arith.truncf %306 : vector<16x32xf32> to vector<16x32xbf16>
    %cst_100 = arith.constant dense<0.000000e+00> : vector<16x64xf32>
    %308 = tpu.matmul %307, %222, %cst_100 {dimension_numbers = #tpu.dot_dimension_numbers<[1], [0], [0], [1], [0, 0, 1, 1], [], []>} : vector<16x32xbf16>, vector<32x64xbf16>, vector<16x64xf32> -> vector<16x64xf32>
    %c14 = arith.constant 14 : index
    %c0_101 = arith.constant 0 : index
    %309 = vector.load %arg3[%c14, %c0_101] : memref<19x128xf32, #tpu.memory_space<vmem>>, vector<1x64xf32>
    %310 = vector.broadcast %309 : vector<1x64xf32> to vector<16x64xf32>
    %311 = arith.addf %308, %310 : vector<16x64xf32>
    %cst_102 = arith.constant 5.000000e-01 : f32
    %312 = vector.broadcast %cst_102 : f32 to vector<16x64xf32>
    %313 = arith.mulf %312, %311 : vector<16x64xf32>
    %cst_103 = arith.constant 0.707106769 : f32
    %314 = vector.broadcast %cst_103 : f32 to vector<16x64xf32>
    %315 = arith.mulf %311, %314 : vector<16x64xf32>
    %316 = math.absf %315 : vector<16x64xf32>
    %cst_104 = arith.constant 0.327591091 : f32
    %317 = vector.broadcast %cst_104 : f32 to vector<16x64xf32>
    %318 = arith.mulf %317, %316 : vector<16x64xf32>
    %cst_105 = arith.constant 1.000000e+00 : f32
    %319 = vector.broadcast %cst_105 : f32 to vector<16x64xf32>
    %320 = arith.addf %319, %318 : vector<16x64xf32>
    %cst_106 = arith.constant 1.000000e+00 : f32
    %321 = vector.broadcast %cst_106 : f32 to vector<16x64xf32>
    %322 = arith.divf %321, %320 : vector<16x64xf32>
    %cst_107 = arith.constant 1.06140542 : f32
    %323 = vector.broadcast %cst_107 : f32 to vector<16x64xf32>
    %324 = arith.mulf %323, %322 : vector<16x64xf32>
    %cst_108 = arith.constant -1.45315206 : f32
    %325 = vector.broadcast %cst_108 : f32 to vector<16x64xf32>
    %326 = arith.addf %324, %325 : vector<16x64xf32>
    %327 = arith.mulf %326, %322 : vector<16x64xf32>
    %cst_109 = arith.constant 1.42141378 : f32
    %328 = vector.broadcast %cst_109 : f32 to vector<16x64xf32>
    %329 = arith.addf %327, %328 : vector<16x64xf32>
    %330 = arith.mulf %329, %322 : vector<16x64xf32>
    %cst_110 = arith.constant -0.284496725 : f32
    %331 = vector.broadcast %cst_110 : f32 to vector<16x64xf32>
    %332 = arith.addf %330, %331 : vector<16x64xf32>
    %333 = arith.mulf %332, %322 : vector<16x64xf32>
    %cst_111 = arith.constant 0.254829586 : f32
    %334 = vector.broadcast %cst_111 : f32 to vector<16x64xf32>
    %335 = arith.addf %333, %334 : vector<16x64xf32>
    %336 = arith.mulf %335, %322 : vector<16x64xf32>
    %cst_112 = arith.constant 0.000000e+00 : f32
    %337 = vector.broadcast %cst_112 : f32 to vector<16x64xf32>
    %338 = arith.subf %337, %316 : vector<16x64xf32>
    %339 = arith.mulf %338, %316 : vector<16x64xf32>
    %340 = math.exp %339 : vector<16x64xf32>
    %341 = arith.mulf %336, %340 : vector<16x64xf32>
    %cst_113 = arith.constant 1.000000e+00 : f32
    %342 = vector.broadcast %cst_113 : f32 to vector<16x64xf32>
    %343 = arith.subf %342, %341 : vector<16x64xf32>
    %cst_114 = arith.constant 0.000000e+00 : f32
    %344 = vector.broadcast %cst_114 : f32 to vector<16x64xf32>
    %345 = arith.cmpf oge, %315, %344 : vector<16x64xf32>
    %cst_115 = arith.constant 0.000000e+00 : f32
    %346 = vector.broadcast %cst_115 : f32 to vector<16x64xf32>
    %347 = arith.subf %346, %343 : vector<16x64xf32>
    %348 = arith.select %345, %343, %347 : vector<16x64xi1>, vector<16x64xf32>
    %cst_116 = arith.constant 1.000000e+00 : f32
    %349 = vector.broadcast %cst_116 : f32 to vector<16x64xf32>
    %350 = arith.addf %349, %348 : vector<16x64xf32>
    %351 = arith.mulf %313, %350 : vector<16x64xf32>
    %352 = arith.truncf %351 : vector<16x64xf32> to vector<16x64xbf16>
    %cst_117 = arith.constant dense<0.000000e+00> : vector<16x32xf32>
    %353 = tpu.matmul %352, %224, %cst_117 {dimension_numbers = #tpu.dot_dimension_numbers<[1], [0], [0], [1], [0, 0, 1, 1], [], []>} : vector<16x64xbf16>, vector<64x32xbf16>, vector<16x32xf32> -> vector<16x32xf32>
    %c15 = arith.constant 15 : index
    %c0_118 = arith.constant 0 : index
    %354 = vector.load %arg3[%c15, %c0_118] : memref<19x128xf32, #tpu.memory_space<vmem>>, vector<1x32xf32>
    %355 = vector.broadcast %354 : vector<1x32xf32> to vector<16x32xf32>
    %356 = arith.addf %353, %355 : vector<16x32xf32>
    %357 = arith.addf %356, %306 : vector<16x32xf32>
    %cst_119 = arith.constant dense<0.000000e+00> : vector<16xf32>
    %358 = vector.multi_reduction <add>, %357, %cst_119 [1] : vector<16x32xf32> to vector<16xf32>
    %359 = vector.shape_cast %358 : vector<16xf32> to vector<16x1xf32>
    %cst_120 = arith.constant 3.200000e+01 : f32
    %360 = vector.broadcast %cst_120 : f32 to vector<16x1xf32>
    %361 = arith.divf %359, %360 : vector<16x1xf32>
    %362 = vector.broadcast %361 : vector<16x1xf32> to vector<16x32xf32>
    %363 = arith.subf %357, %362 : vector<16x32xf32>
    %364 = arith.mulf %363, %363 : vector<16x32xf32>
    %cst_121 = arith.constant dense<0.000000e+00> : vector<16xf32>
    %365 = vector.multi_reduction <add>, %364, %cst_121 [1] : vector<16x32xf32> to vector<16xf32>
    %366 = vector.shape_cast %365 : vector<16xf32> to vector<16x1xf32>
    %cst_122 = arith.constant 3.200000e+01 : f32
    %367 = vector.broadcast %cst_122 : f32 to vector<16x1xf32>
    %368 = arith.divf %366, %367 : vector<16x1xf32>
    %369 = vector.broadcast %361 : vector<16x1xf32> to vector<16x32xf32>
    %370 = arith.subf %357, %369 : vector<16x32xf32>
    %cst_123 = arith.constant 9.99999996E-13 : f32
    %371 = vector.broadcast %cst_123 : f32 to vector<16x1xf32>
    %372 = arith.addf %368, %371 : vector<16x1xf32>
    %373 = math.rsqrt %372 : vector<16x1xf32>
    %374 = vector.broadcast %373 : vector<16x1xf32> to vector<16x32xf32>
    %375 = arith.mulf %370, %374 : vector<16x32xf32>
    %c16 = arith.constant 16 : index
    %c0_124 = arith.constant 0 : index
    %376 = vector.load %arg3[%c16, %c0_124] : memref<19x128xf32, #tpu.memory_space<vmem>>, vector<1x32xf32>
    %377 = vector.broadcast %376 : vector<1x32xf32> to vector<16x32xf32>
    %378 = arith.mulf %375, %377 : vector<16x32xf32>
    %c17 = arith.constant 17 : index
    %c0_125 = arith.constant 0 : index
    %379 = vector.load %arg3[%c17, %c0_125] : memref<19x128xf32, #tpu.memory_space<vmem>>, vector<1x32xf32>
    %380 = vector.broadcast %379 : vector<1x32xf32> to vector<16x32xf32>
    %381 = arith.addf %378, %380 : vector<16x32xf32>
    %382 = vector.extract_strided_slice %381 {offsets = [0, 0], sizes = [1, 32], strides = [1, 1]} : vector<16x32xf32> to vector<1x32xf32>
    %383 = vector.extract_strided_slice %381 {offsets = [8, 0], sizes = [1, 32], strides = [1, 1]} : vector<16x32xf32> to vector<1x32xf32>
    %384 = tpu.concatenate %382, %383 in 0 : vector<1x32xf32>, vector<1x32xf32> -> vector<2x32xf32>
    %cst_126 = arith.constant 0.000000e+00 : f32
    %385 = vector.broadcast %cst_126 : f32 to vector<6x32xf32>
    %386 = tpu.concatenate %384, %385 in 0 : vector<2x32xf32>, vector<6x32xf32> -> vector<8x32xf32>
    %c2_127 = arith.constant 2 : index
    %c0_128 = arith.constant 0 : index
    %c0_129 = arith.constant 0 : index
    %387 = vector.load %arg4[%c2_127, %c0_128, %c0_129] : memref<3x32x192xbf16, #tpu.memory_space<vmem>>, vector<1x32x192xbf16>
    %388 = vector.shape_cast %387 : vector<1x32x192xbf16> to vector<32x192xbf16>
    %389 = vector.extract_strided_slice %388 {offsets = [0, 0], sizes = [32, 128], strides = [1, 1]} : vector<32x192xbf16> to vector<32x128xbf16>
    %390 = arith.truncf %386 : vector<8x32xf32> to vector<8x32xbf16>
    %cst_130 = arith.constant dense<0.000000e+00> : vector<8x128xf32>
    %391 = tpu.matmul %390, %389, %cst_130 {dimension_numbers = #tpu.dot_dimension_numbers<[1], [0], [0], [1], [0, 0, 1, 1], [], []>} : vector<8x32xbf16>, vector<32x128xbf16>, vector<8x128xf32> -> vector<8x128xf32>
    %c18 = arith.constant 18 : index
    %c0_131 = arith.constant 0 : index
    %392 = vector.load %arg3[%c18, %c0_131] : memref<19x128xf32, #tpu.memory_space<vmem>>, vector<1x128xf32>
    %393 = vector.broadcast %392 : vector<1x128xf32> to vector<8x128xf32>
    %394 = arith.addf %391, %393 : vector<8x128xf32>
    %c0_132 = arith.constant 0 : index
    %c0_133 = arith.constant 0 : index
    %395 = vector.load %arg6[%c0_132, %c0_133] : memref<8x128xf32, #tpu.memory_space<vmem>>, vector<8x128xf32>
    tpu.vector_store %arg6[%c0_132, %c0_133], %394 {strides = array<i32>} : memref<8x128xf32, #tpu.memory_space<vmem>>, vector<8x128xf32>,
    return
  }
}

</mosaic_0001>

<llo_original>
// kernel: bert_class_forward.1
$region0: #{bert_class_forward.1}
  #allocation0 [shape = 'u32[]', space=smem, size = 0x4, offset = 0x4, fixed_abs, tag = 'smem constant byte address 0x4 - core index']
  #allocation1 [shape = 'u32[144,128]{1,0:T(1,128)}', space=vmem, size = 0x12000, scoped, tag = 'internal scratch']
  %s0 = inlined_call_operand.vmem [shape: s32[16,2], index: 0, kind: input, shape index: {}]
  %s1 = inlined_call_operand.vmem [shape: f32[2,8], index: 1, kind: input, shape index: {}]
  %s2 = inlined_call_operand.vmem [shape: f32[146,32], index: 2, kind: input, shape index: {}]
  %s3 = inlined_call_operand.vmem [shape: f32[19,128], index: 3, kind: input, shape index: {}]
  %s4 = inlined_call_operand.vmem [shape: bf16[3,32,192], index: 4, kind: input, shape index: {}]
  %s5 = inlined_call_operand.vmem [shape: bf16[2,64,32], index: 5, kind: input, shape index: {}]
  %s6 = inlined_call_operand.vmem [shape: f32[8,128], index: 6, kind: output, shape index: {}]
  %s7 = sld [smem:[#allocation0]]
  $region34: #{bert_class_forward.1} parent=0
    _
  %s9 = ssub.s32 1, %s7
  %s10 = scalar_select 0, %s9, %s7
  // Predicated region
  $region2: #{bert_class_forward.1} parent=0 // pred_check
    _
  $region3: #{bert_class_forward.1} parent=0 // pred_check_branch
    %12 = sbr.rel (0) target = $region5
  $region4: #{bert_class_forward.1} parent=0 // pred_region
    _
  $region5: #{bert_class_forward.1} parent=0 // pred_fallthru
    _
  // Predicated region
  $region6: #{bert_class_forward.1} parent=0 // pred_check
    _
  $region7: #{bert_class_forward.1} parent=0 // pred_check_branch
    %14 = sbr.rel (0) target = $region9
  $region8: #{bert_class_forward.1} parent=0 // pred_region
    _
  $region9: #{bert_class_forward.1} parent=0 // pred_fallthru
    _
  // Predicated region
  $region10: #{bert_class_forward.1} parent=0 // pred_check
    _
  $region11: #{bert_class_forward.1} parent=0 // pred_check_branch
    %16 = sbr.rel (0) target = $region13
  $region12: #{bert_class_forward.1} parent=0 // pred_region
    _
  $region13: #{bert_class_forward.1} parent=0 // pred_fallthru
    _
  // Predicated region
  $region14: #{bert_class_forward.1} parent=0 // pred_check
    _
  $region15: #{bert_class_forward.1} parent=0 // pred_check_branch
    %18 = sbr.rel (0) target = $region17
  $region16: #{bert_class_forward.1} parent=0 // pred_region
    _
  $region17: #{bert_class_forward.1} parent=0 // pred_fallthru
    _
  // Predicated region
  $region18: #{bert_class_forward.1} parent=0 // pred_check
    _
  $region19: #{bert_class_forward.1} parent=0 // pred_check_branch
    %20 = sbr.rel (0) target = $region21
  $region20: #{bert_class_forward.1} parent=0 // pred_region
    _
  $region21: #{bert_class_forward.1} parent=0 // pred_fallthru
    _
  // Predicated region
  $region22: #{bert_class_forward.1} parent=0 // pred_check
    _
  $region23: #{bert_class_forward.1} parent=0 // pred_check_branch
    %22 = sbr.rel (0) target = $region25
  $region24: #{bert_class_forward.1} parent=0 // pred_region
    _
  $region25: #{bert_class_forward.1} parent=0 // pred_fallthru
    _
  %v24 = vld [vmem:[%s0] sm:$0xff]
  %v25 = vld [vmem:[%s0 + $0x8] sm:$0xff]
  %v26 = vlaneseq
  %v27 = vand.u32 %v26, 127
  %28 = vset.pattern.permute.xlu0 0
  %29 = vperm.xlu0 %28, %v24
  %v30 = vpop.permute.xlu0 %29
  %31 = vset.pattern.permute.xlu0 0
  %32 = vperm.xlu0 %31, %v25
  %v33 = vpop.permute.xlu0 %32
  %vm34 = vcmp.eq.s32.totalorder %v30, %v27
  %vm35 = vcmp.eq.s32.totalorder %v33, %v27
  %v36 = vsel %vm34, 1, 0
  %v37 = vsel %vm35, 1, 0
  %v38 = vcvt.s32.f32 %v36
  %v39 = vcvt.s32.f32 %v37
  %v40 = vld [vmem:[%s2] sm:$0xff]
  %v41 = vld [vmem:[%s2 + $0x8] sm:$0xff]
  %v42 = vld [vmem:[%s2 + $0x10] sm:$0xff]
  %v43 = vld [vmem:[%s2 + $0x18] sm:$0xff]
  %v44 = vld [vmem:[%s2 + $0x20] sm:$0xff]
  %v45 = vld [vmem:[%s2 + $0x28] sm:$0xff]
  %v46 = vld [vmem:[%s2 + $0x30] sm:$0xff]
  %v47 = vld [vmem:[%s2 + $0x38] sm:$0xff]
  %v48 = vld [vmem:[%s2 + $0x40] sm:$0xff]
  %v49 = vld [vmem:[%s2 + $0x48] sm:$0xff]
  %v50 = vld [vmem:[%s2 + $0x50] sm:$0xff]
  %v51 = vld [vmem:[%s2 + $0x58] sm:$0xff]
  %v52 = vld [vmem:[%s2 + $0x60] sm:$0xff]
  %v53 = vld [vmem:[%s2 + $0x68] sm:$0xff]
  %v54 = vld [vmem:[%s2 + $0x70] sm:$0xff]
  %v55 = vld [vmem:[%s2 + $0x78] sm:$0xff]
  %v56 = vld [vmem:[%s2 + $0x80] sm:$0xff]
  %v57 = vcvt.s32.f32 %v24
  %v58 = vcvt.s32.f32 %v25
  %v59 = vld [vmem:[%s2 + $0x90] sm:$0x1]
  %v60 = vld [vmem:[%s2 + $0x91] sm:$0x1]
  %v61 = vsub.f32 %v60, %v59
  %63 = vset.pattern.permute.xlu0 1
  %64 = vperm.xlu0 %63, %v57
  %v65 = vpop.permute.xlu0 %64
  %68 = vset.pattern.permute.xlu0 1
  %69 = vperm.xlu0 %68, %v58
  %v70 = vpop.permute.xlu0 %69
  %v72 = vlaneseq
  %v73 = vshrl.u32 %v72, 7
  %v74 = vsub.s32 0, %v73
  %v75 = vrot.slane %v61, %v74
  %v76 = vmul.f32 %v65, %v75
  %v77 = vmul.f32 %v70, %v75
  %v78 = vlaneseq
  %v79 = vshrl.u32 %v78, 7
  %v80 = vsub.s32 0, %v79
  %v81 = vrot.slane %v59, %v80
  %v82 = vadd.f32 %v81, %v76
  %v83 = vadd.f32 %v81, %v77
  %84 = vmatprep.subr.mxu0 0.0
  %85 = vmatpush1.msra.mxu0 %v40
  %86 = vmatprep.subr.mxu0 0.0
  %87 = vmatpush1.msra.mxu0 %v41
  %88 = vmatprep.subr.mxu0 0.0
  %89 = vmatpush1.msra.mxu0 %v42
  %90 = vmatprep.subr.mxu0 0.0
  %91 = vmatpush1.msra.mxu0 %v43
  %92 = vmatprep.subr.mxu0 0.0
  %93 = vmatpush1.msra.mxu0 %v44
  %94 = vmatprep.subr.mxu0 0.0
  %95 = vmatpush1.msra.mxu0 %v45
  %96 = vmatprep.subr.mxu0 0.0
  %97 = vmatpush1.msra.mxu0 %v46
  %98 = vmatprep.subr.mxu0 0.0
  %99 = vmatpush1.msra.mxu0 %v47
  %100 = vmatprep.subr.mxu0 0.0
  %101 = vmatpush1.msra.mxu0 %v48
  %102 = vmatprep.subr.mxu0 0.0
  %103 = vmatpush1.msra.mxu0 %v49
  %104 = vmatprep.subr.mxu0 0.0
  %105 = vmatpush1.msra.mxu0 %v50
  %106 = vmatprep.subr.mxu0 0.0
  %107 = vmatpush1.msra.mxu0 %v51
  %108 = vmatprep.subr.mxu0 0.0
  %109 = vmatpush1.msra.mxu0 %v52
  %110 = vmatprep.subr.mxu0 0.0
  %111 = vmatpush1.msra.mxu0 %v53
  %112 = vmatprep.subr.mxu0 0.0
  %113 = vmatpush1.msra.mxu0 %v54
  %114 = vmatprep.subr.mxu0 0.0
  %115 = vmatpush1.msra.mxu0 %v55
  %116 = vmatprep.subr.mxu0 0.0
  %117 = vmatpush1.msra.mxu0 0.0
  %118 = vmatprep.subr.mxu0 0.0
  %119 = vmatpush1.msra.mxu0 0.0
  %120 = vmatprep.subr.mxu0 0.0
  %121 = vmatpush1.msra.mxu0 0.0
  %122 = vmatprep.subr.mxu0 0.0
  %123 = vmatpush1.msra.mxu0 0.0
  %124 = vmatprep.subr.mxu0 0.0
  %125 = vmatpush1.msra.mxu0 0.0
  %126 = vmatprep.subr.mxu0 0.0
  %127 = vmatpush1.msra.mxu0 0.0
  %128 = vmatprep.subr.mxu0 0.0
  %129 = vmatpush1.msra.mxu0 0.0
  %130 = vmatprep.subr.mxu0 0.0
  %131 = vmatpush1.msra.mxu0 0.0
  %132 = vmatprep.subr.mxu0 0.0
  %133 = vmatpush1.msra.mxu0 0.0
  %134 = vmatprep.subr.mxu0 0.0
  %135 = vmatpush1.msra.mxu0 0.0
  %136 = vmatprep.subr.mxu0 0.0
  %137 = vmatpush1.msra.mxu0 0.0
  %138 = vmatprep.subr.mxu0 0.0
  %139 = vmatpush1.msra.mxu0 0.0
  %140 = vmatprep.subr.mxu0 0.0
  %141 = vmatpush1.msra.mxu0 0.0
  %142 = vmatprep.subr.mxu0 0.0
  %143 = vmatpush1.msra.mxu0 0.0
  %144 = vmatprep.subr.mxu0 0.0
  %145 = vmatpush1.msra.mxu0 0.0
  %146 = vmatprep.subr.mxu0 0.0
  %147 = vmatpush1.msra.mxu0 0.0
  %148 = vmatprep.mubr.f32.mxu0 0.0
  %149 = vmatmul.mubr.f32.gmra.mrb[0].mxu0 %v38
  %v150 = vpop.f32.mrb[0].mxu0
  %v151 = vadd.f32 %v56, %v150
  %v152 = vpop.f32.mrb[0].mxu0
  %153 = vmatprep.mubr.f32.mxu0 0.0
  %154 = vmatmul.mubr.f32.gmra.mrb[0].mxu0 %v39
  %v155 = vpop.f32.mrb[0].mxu0
  %v156 = vadd.f32 %v56, %v155
  %v157 = vpop.f32.mrb[0].mxu0
  %158 = vdwg.mxu0
  %v159 = vadd.f32 %v151, %v82
  %v160 = vadd.f32 %v156, %v83
  %vm161 = vcmask 261120
  %v162 = vsel %vm161, %v159, 0.0
  %163 = vadd.xlane.f32.xlu0 %v162
  %v164 = vpop.xlane.xlu0 %163
  %v165 = vsel %vm161, %v160, 0.0
  %166 = vadd.xlane.f32.xlu0 %v165
  %v167 = vpop.xlane.xlu0 %166
  %v168 = vrcp.pop 32.0
  %v169 = vmul.f32 %v164, %v168
  %v170 = vmul.f32 %v167, %v168
  %v171 = vsub.f32 %v159, %v169
  %v172 = vsub.f32 %v160, %v170
  %v173 = vmul.f32 %v171, %v171
  %v174 = vmul.f32 %v172, %v172
  %v175 = vsel %vm161, %v173, 0.0
  %176 = vadd.xlane.f32.xlu0 %v175
  %v177 = vpop.xlane.xlu0 %176
  %v178 = vsel %vm161, %v174, 0.0
  %179 = vadd.xlane.f32.xlu0 %v178
  %v180 = vpop.xlane.xlu0 %179
  %v181 = vmul.f32 %v177, %v168
  %v182 = vmul.f32 %v180, %v168
  %v183 = vadd.f32 %v181, 1e-12
  %v184 = vadd.f32 %v182, 1e-12
  %v185 = vrsqrt.pop %v183
  %v186 = vrsqrt.pop %v184
  %v187 = vmul.f32 %v171, %v185
  %v188 = vmul.f32 %v172, %v186
  %v189 = vld [vmem:[%s3] sm:$0x1]
  %v190 = vlaneseq
  %v191 = vshrl.u32 %v190, 7
  %v192 = vsub.s32 0, %v191
  %v193 = vrot.slane %v189, %v192
  %v194 = vmul.f32 %v187, %v193
  %v195 = vmul.f32 %v188, %v193
  %v196 = vld [vmem:[%s3 + $0x1] sm:$0x1]
  %v197 = vlaneseq
  %v198 = vshrl.u32 %v197, 7
  %v199 = vsub.s32 0, %v198
  %v200 = vrot.slane %v196, %v199
  %v201 = vadd.f32 %v194, %v200
  %v202 = vadd.f32 %v195, %v200
  %v203 = vld [vmem:[%s1] sm:$0x3]
  %v204 = vsub.f32 1.0, %v203
  %v205 = vmul.f32 %v204, -10000.0
  %v208 = vunpack.c.l.s4 1966171168
  %v209 = vunpack.c.0.s8 %v208
  %v210 = vlaneseq
  %v211 = vshrl.u32 %v210, 7
  %v212 = vsub.s32 %v209, %v211
  %v213 = vrot.slane %v205, %v212
  %v214 = vcombine.high %v213, %v213
  %v216 = vunpack.c.l.s4 1966171168
  %v217 = vunpack.c.0.s8 %v216
  %v218 = vlaneseq
  %v219 = vshrl.u32 %v218, 7
  %v220 = vsub.s32 %v217, %v219
  %v221 = vrot.slane %v213, %v220
  %v223 = vunpack.c.l.s4 1966171168
  %v224 = vunpack.c.0.s8 %v223
  %v225 = vlaneseq
  %v226 = vshrl.u32 %v225, 7
  %v227 = vsub.s32 %v224, %v226
  %v228 = vrot.slane %v214, %v227
  %v229 = vlaneseq
  %v230 = vshrl.u32 %v229, 7
  %v231 = vsub.s32 0, %v230
  %v232 = vrot.slane %v221, %v231
  %v233 = vlaneseq
  %v234 = vshrl.u32 %v233, 7
  %v235 = vsub.s32 0, %v234
  %v236 = vrot.slane %v228, %v235
  %v239 = vld [vmem:[%s4] sm:$0xff]
  %v240 = vld [vmem:[%s4 + $0x8] sm:$0xff]
  %v241 = vld [vmem:[%s4 + $0x10] sm:$0xff]
  %v242 = vld [vmem:[%s4 + $0x18] sm:$0xff]
  %v243 = vld [vmem:[%s5] sm:$0xf]
  %v244 = vld [vmem:[%s5 + $0x4] sm:$0xf]
  %v245 = vld [vmem:[%s5 + $0x8] sm:$0xf]
  %v246 = vld [vmem:[%s5 + $0xc] sm:$0xf]
  %v247 = vld [vmem:[%s5 + $0x10] sm:$0xf]
  %v248 = vld [vmem:[%s5 + $0x14] sm:$0xf]
  %v249 = vld [vmem:[%s5 + $0x18] sm:$0xf]
  %v250 = vld [vmem:[%s5 + $0x1c] sm:$0xf]
  %v251 = vpack.c.bf16 %v202, %v201
  %v252 = vld [vmem:[%s3 + $0x2] sm:$0x1]
  %v253 = vlaneseq
  %v254 = vshrl.u32 %v253, 7
  %v255 = vsub.s32 0, %v254
  %v256 = vrot.slane %v252, %v255
  %v261 = vunpack.c.l.b16 %v239
  %v262 = vunpack.c.l.b16 %v240
  %v263 = vunpack.c.l.b16 %v241
  %v264 = vunpack.c.l.b16 %v242
  %v265 = vpack.c.b16 %v262, %v261
  %v266 = vpack.c.b16 %v264, %v263
  %v270 = vsel %vm161, %v251, 0
  %272 = vmatprep.subr.bf16.mxu0 0
  %273 = vmatpush1.bf16.msra.mxu0 %v265
  %274 = vmatprep.subr.bf16.mxu0 0
  %275 = vmatpush1.bf16.msra.mxu0 %v266
  %276 = vmatprep.subr.bf16.mxu0 0
  %277 = vmatpush1.bf16.msra.mxu0 0
  %278 = vmatprep.subr.bf16.mxu0 0
  %279 = vmatpush1.bf16.msra.mxu0 0
  %280 = vmatprep.subr.bf16.mxu0 0
  %281 = vmatpush1.bf16.msra.mxu0 0
  %282 = vmatprep.subr.bf16.mxu0 0
  %283 = vmatpush1.bf16.msra.mxu0 0
  %284 = vmatprep.subr.bf16.mxu0 0
  %285 = vmatpush1.bf16.msra.mxu0 0
  %286 = vmatprep.subr.bf16.mxu0 0
  %287 = vmatpush1.bf16.msra.mxu0 0
  %288 = vmatprep.subr.bf16.mxu0 0
  %289 = vmatpush1.bf16.msra.mxu0 0
  %290 = vmatprep.subr.bf16.mxu0 0
  %291 = vmatpush1.bf16.msra.mxu0 0
  %292 = vmatprep.subr.bf16.mxu0 0
  %293 = vmatpush1.bf16.msra.mxu0 0
  %294 = vmatprep.subr.bf16.mxu0 0
  %295 = vmatpush1.bf16.msra.mxu0 0
  %296 = vmatprep.subr.bf16.mxu0 0
  %297 = vmatpush1.bf16.msra.mxu0 0
  %298 = vmatprep.subr.bf16.mxu0 0
  %299 = vmatpush1.bf16.msra.mxu0 0
  %300 = vmatprep.subr.bf16.mxu0 0
  %301 = vmatpush1.bf16.msra.mxu0 0
  %302 = vmatprep.subr.bf16.mxu0 0
  %303 = vmatpush1.bf16.msra.mxu0 0
  %304 = vmatprep.mubr.bf16.mxu0 0
  %305 = vmatmul.mubr.bf16.gmra.mrb[0].mxu0 %v270
  %v306 = vpop.f32.mrb[0].mxu0
  %v307 = vadd.f32 %v256, %v306
  %v308 = vpop.f32.mrb[0].mxu0
  %v309 = vpop.f32.mrb[0].mxu0
  %v310 = vadd.f32 %v256, %v309
  %v311 = vpop.f32.mrb[0].mxu0
  %312 = vdwg.mxu0
  %v313 = vpack.c.bf16 %v307, %v307
  %v314 = vpack.c.bf16 %v310, %v310
  %316 = vrot.lane.b32.xlu0 %v313, 96
  %v317 = vpop.permute.xlu0 %316
  %vm318 = vcmask 130048
  %v320 = vsel %vm318, %v313, 0
  %v323 = vsel %vm318, %v317, 0
  %325 = vmatprep.subr.bf16.mxu0 0
  %326 = vmatpush1.bf16.xpose.msra.mxu0 %v323
  %327 = vmatprep.subr.bf16.mxu0 0
  %328 = vmatpush1.bf16.xpose.msra.mxu0 0
  %329 = vmatprep.subr.bf16.mxu0 0
  %330 = vmatpush1.bf16.xpose.msra.mxu0 0
  %331 = vmatprep.subr.bf16.mxu0 0
  %332 = vmatpush1.bf16.xpose.msra.mxu0 0
  %333 = vmatprep.subr.bf16.mxu0 0
  %334 = vmatpush1.bf16.xpose.msra.mxu0 0
  %335 = vmatprep.subr.bf16.mxu0 0
  %336 = vmatpush1.bf16.xpose.msra.mxu0 0
  %337 = vmatprep.subr.bf16.mxu0 0
  %338 = vmatpush1.bf16.xpose.msra.mxu0 0
  %339 = vmatprep.subr.bf16.mxu0 0
  %340 = vmatpush1.bf16.xpose.msra.mxu0 0
  %341 = vmatprep.subr.bf16.mxu0 0
  %342 = vmatpush1.bf16.xpose.msra.mxu0 0
  %343 = vmatprep.subr.bf16.mxu0 0
  %344 = vmatpush1.bf16.xpose.msra.mxu0 0
  %345 = vmatprep.subr.bf16.mxu0 0
  %346 = vmatpush1.bf16.xpose.msra.mxu0 0
  %347 = vmatprep.subr.bf16.mxu0 0
  %348 = vmatpush1.bf16.xpose.msra.mxu0 0
  %349 = vmatprep.subr.bf16.mxu0 0
  %350 = vmatpush1.bf16.xpose.msra.mxu0 0
  %351 = vmatprep.subr.bf16.mxu0 0
  %352 = vmatpush1.bf16.xpose.msra.mxu0 0
  %353 = vmatprep.subr.bf16.mxu0 0
  %354 = vmatpush1.bf16.xpose.msra.mxu0 0
  %355 = vmatprep.subr.bf16.mxu0 0
  %356 = vmatpush1.bf16.xpose.msra.mxu0 0
  %357 = vmatprep.mubr.bf16.mxu0 0
  %358 = vmatmul.mubr.bf16.gmra.mrb[0].mxu0 %v320
  %v359 = vpop.f32.mrb[0].mxu0
  %v360 = vadd.f32 0.0, %v359
  %v361 = vpop.f32.mrb[0].mxu0
  %v362 = vpop.f32.mrb[0].mxu0
  %v363 = vpop.f32.mrb[0].mxu0
  %364 = vdwg.mxu0
  %366 = vrot.lane.b32.xlu0 %v314, 96
  %v367 = vpop.permute.xlu0 %366
  %v369 = vsel %vm318, %v314, 0
  %v372 = vsel %vm318, %v367, 0
  %374 = vmatprep.subr.bf16.mxu0 0
  %375 = vmatpush1.bf16.xpose.msra.mxu0 %v372
  %376 = vmatprep.subr.bf16.mxu0 0
  %377 = vmatpush1.bf16.xpose.msra.mxu0 0
  %378 = vmatprep.subr.bf16.mxu0 0
  %379 = vmatpush1.bf16.xpose.msra.mxu0 0
  %380 = vmatprep.subr.bf16.mxu0 0
  %381 = vmatpush1.bf16.xpose.msra.mxu0 0
  %382 = vmatprep.subr.bf16.mxu0 0
  %383 = vmatpush1.bf16.xpose.msra.mxu0 0
  %384 = vmatprep.subr.bf16.mxu0 0
  %385 = vmatpush1.bf16.xpose.msra.mxu0 0
  %386 = vmatprep.subr.bf16.mxu0 0
  %387 = vmatpush1.bf16.xpose.msra.mxu0 0
  %388 = vmatprep.subr.bf16.mxu0 0
  %389 = vmatpush1.bf16.xpose.msra.mxu0 0
  %390 = vmatprep.subr.bf16.mxu0 0
  %391 = vmatpush1.bf16.xpose.msra.mxu0 0
  %392 = vmatprep.subr.bf16.mxu0 0
  %393 = vmatpush1.bf16.xpose.msra.mxu0 0
  %394 = vmatprep.subr.bf16.mxu0 0
  %395 = vmatpush1.bf16.xpose.msra.mxu0 0
  %396 = vmatprep.subr.bf16.mxu0 0
  %397 = vmatpush1.bf16.xpose.msra.mxu0 0
  %398 = vmatprep.subr.bf16.mxu0 0
  %399 = vmatpush1.bf16.xpose.msra.mxu0 0
  %400 = vmatprep.subr.bf16.mxu0 0
  %401 = vmatpush1.bf16.xpose.msra.mxu0 0
  %402 = vmatprep.subr.bf16.mxu0 0
  %403 = vmatpush1.bf16.xpose.msra.mxu0 0
  %404 = vmatprep.subr.bf16.mxu0 0
  %405 = vmatpush1.bf16.xpose.msra.mxu0 0
  %406 = vmatprep.mubr.bf16.mxu0 0
  %407 = vmatmul.mubr.bf16.gmra.mrb[0].mxu0 %v369
  %v408 = vpop.f32.mrb[0].mxu0
  %v409 = vadd.f32 0.0, %v408
  %v410 = vpop.f32.mrb[0].mxu0
  %v411 = vpop.f32.mrb[0].mxu0
  %v412 = vpop.f32.mrb[0].mxu0
  %413 = vdwg.mxu0
  %v414 = vmul.f32 %v360, 0.25
  %v415 = vmul.f32 %v409, 0.25
  %v416 = vadd.f32 %v414, %v232
  %v417 = vadd.f32 %v415, %v236
  %vm418 = vcmask 64512
  %v419 = vsel %vm418, %v416, -inf
  %420 = vmax.xlane.f32.xlu0 %v419
  %v421 = vpop.xlane.xlu0 %420
  %v422 = vsel %vm418, %v417, -inf
  %423 = vmax.xlane.f32.xlu0 %v422
  %v424 = vpop.xlane.xlu0 %423
  %v425 = vsub.f32 %v416, %v421
  %v426 = vsub.f32 %v417, %v424
  %v427 = vmul.f32 %v425, 1.442695
  %v428 = vpow.pop %v427
  %v429 = vmul.f32 %v426, 1.442695
  %v430 = vpow.pop %v429
  %v431 = vsel %vm418, %v428, 0.0
  %432 = vadd.xlane.f32.xlu0 %v431
  %v433 = vpop.xlane.xlu0 %432
  %v434 = vsel %vm418, %v430, 0.0
  %435 = vadd.xlane.f32.xlu0 %v434
  %v436 = vpop.xlane.xlu0 %435
  %v437 = vrcp.pop %v433
  %v438 = vrcp.pop %v436
  %v439 = vmul.f32 %v428, %v437
  %v440 = vmul.f32 %v430, %v438
  %v441 = vpack.c.bf16 %v439, %v439
  %v442 = vpack.c.bf16 %v440, %v440
  %443 = vrot.lane.b32.xlu0 %v313, 64
  %v444 = vpop.permute.xlu0 %443
  %v446 = vsel %vm418, %v441, 0
  %vm448 = vcmask 1043456
  %v450 = vsel %vm448, %v444, 0
  %452 = vmatprep.subr.bf16.mxu0 0
  %453 = vmatpush1.bf16.msra.mxu0 %v450
  %454 = vmatprep.subr.bf16.mxu0 0
  %455 = vmatpush1.bf16.msra.mxu0 0
  %456 = vmatprep.subr.bf16.mxu0 0
  %457 = vmatpush1.bf16.msra.mxu0 0
  %458 = vmatprep.subr.bf16.mxu0 0
  %459 = vmatpush1.bf16.msra.mxu0 0
  %460 = vmatprep.subr.bf16.mxu0 0
  %461 = vmatpush1.bf16.msra.mxu0 0
  %462 = vmatprep.subr.bf16.mxu0 0
  %463 = vmatpush1.bf16.msra.mxu0 0
  %464 = vmatprep.subr.bf16.mxu0 0
  %465 = vmatpush1.bf16.msra.mxu0 0
  %466 = vmatprep.subr.bf16.mxu0 0
  %467 = vmatpush1.bf16.msra.mxu0 0
  %468 = vmatprep.subr.bf16.mxu0 0
  %469 = vmatpush1.bf16.msra.mxu0 0
  %470 = vmatprep.subr.bf16.mxu0 0
  %471 = vmatpush1.bf16.msra.mxu0 0
  %472 = vmatprep.subr.bf16.mxu0 0
  %473 = vmatpush1.bf16.msra.mxu0 0
  %474 = vmatprep.subr.bf16.mxu0 0
  %475 = vmatpush1.bf16.msra.mxu0 0
  %476 = vmatprep.subr.bf16.mxu0 0
  %477 = vmatpush1.bf16.msra.mxu0 0
  %478 = vmatprep.subr.bf16.mxu0 0
  %479 = vmatpush1.bf16.msra.mxu0 0
  %480 = vmatprep.subr.bf16.mxu0 0
  %481 = vmatpush1.bf16.msra.mxu0 0
  %482 = vmatprep.subr.bf16.mxu0 0
  %483 = vmatpush1.bf16.msra.mxu0 0
  %484 = vmatprep.mubr.bf16.mxu0 0
  %485 = vmatmul.mubr.bf16.gmra.mrb[0].mxu0 %v446
  %v486 = vpop.f32.mrb[0].mxu0
  %v487 = vadd.f32 0.0, %v486
  %v488 = vpop.f32.mrb[0].mxu0
  %v489 = vpop.f32.mrb[0].mxu0
  %v490 = vpop.f32.mrb[0].mxu0
  %491 = vdwg.mxu0
  %492 = vrot.lane.b32.xlu0 %v314, 64
  %v493 = vpop.permute.xlu0 %492
  %v495 = vsel %vm418, %v442, 0
  %v498 = vsel %vm448, %v493, 0
  %500 = vmatprep.subr.bf16.mxu0 0
  %501 = vmatpush1.bf16.msra.mxu0 %v498
  %502 = vmatprep.subr.bf16.mxu0 0
  %503 = vmatpush1.bf16.msra.mxu0 0
  %504 = vmatprep.subr.bf16.mxu0 0
  %505 = vmatpush1.bf16.msra.mxu0 0
  %506 = vmatprep.subr.bf16.mxu0 0
  %507 = vmatpush1.bf16.msra.mxu0 0
  %508 = vmatprep.subr.bf16.mxu0 0
  %509 = vmatpush1.bf16.msra.mxu0 0
  %510 = vmatprep.subr.bf16.mxu0 0
  %511 = vmatpush1.bf16.msra.mxu0 0
  %512 = vmatprep.subr.bf16.mxu0 0
  %513 = vmatpush1.bf16.msra.mxu0 0
  %514 = vmatprep.subr.bf16.mxu0 0
  %515 = vmatpush1.bf16.msra.mxu0 0
  %516 = vmatprep.subr.bf16.mxu0 0
  %517 = vmatpush1.bf16.msra.mxu0 0
  %518 = vmatprep.subr.bf16.mxu0 0
  %519 = vmatpush1.bf16.msra.mxu0 0
  %520 = vmatprep.subr.bf16.mxu0 0
  %521 = vmatpush1.bf16.msra.mxu0 0
  %522 = vmatprep.subr.bf16.mxu0 0
  %523 = vmatpush1.bf16.msra.mxu0 0
  %524 = vmatprep.subr.bf16.mxu0 0
  %525 = vmatpush1.bf16.msra.mxu0 0
  %526 = vmatprep.subr.bf16.mxu0 0
  %527 = vmatpush1.bf16.msra.mxu0 0
  %528 = vmatprep.subr.bf16.mxu0 0
  %529 = vmatpush1.bf16.msra.mxu0 0
  %530 = vmatprep.subr.bf16.mxu0 0
  %531 = vmatpush1.bf16.msra.mxu0 0
  %532 = vmatprep.mubr.bf16.mxu0 0
  %533 = vmatmul.mubr.bf16.gmra.mrb[0].mxu0 %v495
  %v534 = vpop.f32.mrb[0].mxu0
  %v535 = vadd.f32 0.0, %v534
  %v536 = vpop.f32.mrb[0].mxu0
  %v537 = vpop.f32.mrb[0].mxu0
  %v538 = vpop.f32.mrb[0].mxu0
  %539 = vdwg.mxu0
  %540 = vrot.lane.b32.xlu0 %v313, 112
  %v541 = vpop.permute.xlu0 %540
  %542 = vrot.lane.b32.xlu0 %v313, 80
  %v543 = vpop.permute.xlu0 %542
  %v545 = vsel %vm318, %v541, 0
  %v548 = vsel %vm318, %v543, 0
  %550 = vmatprep.subr.bf16.mxu0 0
  %551 = vmatpush1.bf16.xpose.msra.mxu0 %v548
  %552 = vmatprep.subr.bf16.mxu0 0
  %553 = vmatpush1.bf16.xpose.msra.mxu0 0
  %554 = vmatprep.subr.bf16.mxu0 0
  %555 = vmatpush1.bf16.xpose.msra.mxu0 0
  %556 = vmatprep.subr.bf16.mxu0 0
  %557 = vmatpush1.bf16.xpose.msra.mxu0 0
  %558 = vmatprep.subr.bf16.mxu0 0
  %559 = vmatpush1.bf16.xpose.msra.mxu0 0
  %560 = vmatprep.subr.bf16.mxu0 0
  %561 = vmatpush1.bf16.xpose.msra.mxu0 0
  %562 = vmatprep.subr.bf16.mxu0 0
  %563 = vmatpush1.bf16.xpose.msra.mxu0 0
  %564 = vmatprep.subr.bf16.mxu0 0
  %565 = vmatpush1.bf16.xpose.msra.mxu0 0
  %566 = vmatprep.subr.bf16.mxu0 0
  %567 = vmatpush1.bf16.xpose.msra.mxu0 0
  %568 = vmatprep.subr.bf16.mxu0 0
  %569 = vmatpush1.bf16.xpose.msra.mxu0 0
  %570 = vmatprep.subr.bf16.mxu0 0
  %571 = vmatpush1.bf16.xpose.msra.mxu0 0
  %572 = vmatprep.subr.bf16.mxu0 0
  %573 = vmatpush1.bf16.xpose.msra.mxu0 0
  %574 = vmatprep.subr.bf16.mxu0 0
  %575 = vmatpush1.bf16.xpose.msra.mxu0 0
  %576 = vmatprep.subr.bf16.mxu0 0
  %577 = vmatpush1.bf16.xpose.msra.mxu0 0
  %578 = vmatprep.subr.bf16.mxu0 0
  %579 = vmatpush1.bf16.xpose.msra.mxu0 0
  %580 = vmatprep.subr.bf16.mxu0 0
  %581 = vmatpush1.bf16.xpose.msra.mxu0 0
  %582 = vmatprep.mubr.bf16.mxu0 0
  %583 = vmatmul.mubr.bf16.gmra.mrb[0].mxu0 %v545
  %v584 = vpop.f32.mrb[0].mxu0
  %v585 = vadd.f32 0.0, %v584
  %v586 = vpop.f32.mrb[0].mxu0
  %v587 = vpop.f32.mrb[0].mxu0
  %v588 = vpop.f32.mrb[0].mxu0
  %589 = vdwg.mxu0
  %590 = vrot.lane.b32.xlu0 %v314, 112
  %v591 = vpop.permute.xlu0 %590
  %592 = vrot.lane.b32.xlu0 %v314, 80
  %v593 = vpop.permute.xlu0 %592
  %v595 = vsel %vm318, %v591, 0
  %v598 = vsel %vm318, %v593, 0
  %600 = vmatprep.subr.bf16.mxu0 0
  %601 = vmatpush1.bf16.xpose.msra.mxu0 %v598
  %602 = vmatprep.subr.bf16.mxu0 0
  %603 = vmatpush1.bf16.xpose.msra.mxu0 0
  %604 = vmatprep.subr.bf16.mxu0 0
  %605 = vmatpush1.bf16.xpose.msra.mxu0 0
  %606 = vmatprep.subr.bf16.mxu0 0
  %607 = vmatpush1.bf16.xpose.msra.mxu0 0
  %608 = vmatprep.subr.bf16.mxu0 0
  %609 = vmatpush1.bf16.xpose.msra.mxu0 0
  %610 = vmatprep.subr.bf16.mxu0 0
  %611 = vmatpush1.bf16.xpose.msra.mxu0 0
  %612 = vmatprep.subr.bf16.mxu0 0
  %613 = vmatpush1.bf16.xpose.msra.mxu0 0
  %614 = vmatprep.subr.bf16.mxu0 0
  %615 = vmatpush1.bf16.xpose.msra.mxu0 0
  %616 = vmatprep.subr.bf16.mxu0 0
  %617 = vmatpush1.bf16.xpose.msra.mxu0 0
  %618 = vmatprep.subr.bf16.mxu0 0
  %619 = vmatpush1.bf16.xpose.msra.mxu0 0
  %620 = vmatprep.subr.bf16.mxu0 0
  %621 = vmatpush1.bf16.xpose.msra.mxu0 0
  %622 = vmatprep.subr.bf16.mxu0 0
  %623 = vmatpush1.bf16.xpose.msra.mxu0 0
  %624 = vmatprep.subr.bf16.mxu0 0
  %625 = vmatpush1.bf16.xpose.msra.mxu0 0
  %626 = vmatprep.subr.bf16.mxu0 0
  %627 = vmatpush1.bf16.xpose.msra.mxu0 0
  %628 = vmatprep.subr.bf16.mxu0 0
  %629 = vmatpush1.bf16.xpose.msra.mxu0 0
  %630 = vmatprep.subr.bf16.mxu0 0
  %631 = vmatpush1.bf16.xpose.msra.mxu0 0
  %632 = vmatprep.mubr.bf16.mxu0 0
  %633 = vmatmul.mubr.bf16.gmra.mrb[0].mxu0 %v595
  %v634 = vpop.f32.mrb[0].mxu0
  %v635 = vadd.f32 0.0, %v634
  %v636 = vpop.f32.mrb[0].mxu0
  %v637 = vpop.f32.mrb[0].mxu0
  %v638 = vpop.f32.mrb[0].mxu0
  %639 = vdwg.mxu0
  %v640 = vmul.f32 %v585, 0.25
  %v641 = vmul.f32 %v635, 0.25
  %v642 = vadd.f32 %v640, %v232
  %v643 = vadd.f32 %v641, %v236
  %v644 = vsel %vm418, %v642, -inf
  %645 = vmax.xlane.f32.xlu0 %v644
  %v646 = vpop.xlane.xlu0 %645
  %v647 = vsel %vm418, %v643, -inf
  %648 = vmax.xlane.f32.xlu0 %v647
  %v649 = vpop.xlane.xlu0 %648
  %v650 = vsub.f32 %v642, %v646
  %v651 = vsub.f32 %v643, %v649
  %v652 = vmul.f32 %v650, 1.442695
  %v653 = vpow.pop %v652
  %v654 = vmul.f32 %v651, 1.442695
  %v655 = vpow.pop %v654
  %v656 = vsel %vm418, %v653, 0.0
  %657 = vadd.xlane.f32.xlu0 %v656
  %v658 = vpop.xlane.xlu0 %657
  %v659 = vsel %vm418, %v655, 0.0
  %660 = vadd.xlane.f32.xlu0 %v659
  %v661 = vpop.xlane.xlu0 %660
  %v662 = vrcp.pop %v658
  %v663 = vrcp.pop %v661
  %v664 = vmul.f32 %v653, %v662
  %v665 = vmul.f32 %v655, %v663
  %v666 = vpack.c.bf16 %v664, %v664
  %v667 = vpack.c.bf16 %v665, %v665
  %668 = vrot.lane.b32.xlu0 %v313, 48
  %v669 = vpop.permute.xlu0 %668
  %v671 = vsel %vm418, %v666, 0
  %v674 = vsel %vm448, %v669, 0
  %676 = vmatprep.subr.bf16.mxu0 0
  %677 = vmatpush1.bf16.msra.mxu0 %v674
  %678 = vmatprep.subr.bf16.mxu0 0
  %679 = vmatpush1.bf16.msra.mxu0 0
  %680 = vmatprep.subr.bf16.mxu0 0
  %681 = vmatpush1.bf16.msra.mxu0 0
  %682 = vmatprep.subr.bf16.mxu0 0
  %683 = vmatpush1.bf16.msra.mxu0 0
  %684 = vmatprep.subr.bf16.mxu0 0
  %685 = vmatpush1.bf16.msra.mxu0 0
  %686 = vmatprep.subr.bf16.mxu0 0
  %687 = vmatpush1.bf16.msra.mxu0 0
  %688 = vmatprep.subr.bf16.mxu0 0
  %689 = vmatpush1.bf16.msra.mxu0 0
  %690 = vmatprep.subr.bf16.mxu0 0
  %691 = vmatpush1.bf16.msra.mxu0 0
  %692 = vmatprep.subr.bf16.mxu0 0
  %693 = vmatpush1.bf16.msra.mxu0 0
  %694 = vmatprep.subr.bf16.mxu0 0
  %695 = vmatpush1.bf16.msra.mxu0 0
  %696 = vmatprep.subr.bf16.mxu0 0
  %697 = vmatpush1.bf16.msra.mxu0 0
  %698 = vmatprep.subr.bf16.mxu0 0
  %699 = vmatpush1.bf16.msra.mxu0 0
  %700 = vmatprep.subr.bf16.mxu0 0
  %701 = vmatpush1.bf16.msra.mxu0 0
  %702 = vmatprep.subr.bf16.mxu0 0
  %703 = vmatpush1.bf16.msra.mxu0 0
  %704 = vmatprep.subr.bf16.mxu0 0
  %705 = vmatpush1.bf16.msra.mxu0 0
  %706 = vmatprep.subr.bf16.mxu0 0
  %707 = vmatpush1.bf16.msra.mxu0 0
  %708 = vmatprep.mubr.bf16.mxu0 0
  %709 = vmatmul.mubr.bf16.gmra.mrb[0].mxu0 %v671
  %v710 = vpop.f32.mrb[0].mxu0
  %v711 = vadd.f32 0.0, %v710
  %v712 = vpop.f32.mrb[0].mxu0
  %v713 = vpop.f32.mrb[0].mxu0
  %v714 = vpop.f32.mrb[0].mxu0
  %715 = vdwg.mxu0
  %716 = vrot.lane.b32.xlu0 %v314, 48
  %v717 = vpop.permute.xlu0 %716
  %v719 = vsel %vm418, %v667, 0
  %v722 = vsel %vm448, %v717, 0
  %724 = vmatprep.subr.bf16.mxu0 0
  %725 = vmatpush1.bf16.msra.mxu0 %v722
  %726 = vmatprep.subr.bf16.mxu0 0
  %727 = vmatpush1.bf16.msra.mxu0 0
  %728 = vmatprep.subr.bf16.mxu0 0
  %729 = vmatpush1.bf16.msra.mxu0 0
  %730 = vmatprep.subr.bf16.mxu0 0
  %731 = vmatpush1.bf16.msra.mxu0 0
  %732 = vmatprep.subr.bf16.mxu0 0
  %733 = vmatpush1.bf16.msra.mxu0 0
  %734 = vmatprep.subr.bf16.mxu0 0
  %735 = vmatpush1.bf16.msra.mxu0 0
  %736 = vmatprep.subr.bf16.mxu0 0
  %737 = vmatpush1.bf16.msra.mxu0 0
  %738 = vmatprep.subr.bf16.mxu0 0
  %739 = vmatpush1.bf16.msra.mxu0 0
  %740 = vmatprep.subr.bf16.mxu0 0
  %741 = vmatpush1.bf16.msra.mxu0 0
  %742 = vmatprep.subr.bf16.mxu0 0
  %743 = vmatpush1.bf16.msra.mxu0 0
  %744 = vmatprep.subr.bf16.mxu0 0
  %745 = vmatpush1.bf16.msra.mxu0 0
  %746 = vmatprep.subr.bf16.mxu0 0
  %747 = vmatpush1.bf16.msra.mxu0 0
  %748 = vmatprep.subr.bf16.mxu0 0
  %749 = vmatpush1.bf16.msra.mxu0 0
  %750 = vmatprep.subr.bf16.mxu0 0
  %751 = vmatpush1.bf16.msra.mxu0 0
  %752 = vmatprep.subr.bf16.mxu0 0
  %753 = vmatpush1.bf16.msra.mxu0 0
  %754 = vmatprep.subr.bf16.mxu0 0
  %755 = vmatpush1.bf16.msra.mxu0 0
  %756 = vmatprep.mubr.bf16.mxu0 0
  %757 = vmatmul.mubr.bf16.gmra.mrb[0].mxu0 %v719
  %v758 = vpop.f32.mrb[0].mxu0
  %v759 = vadd.f32 0.0, %v758
  %v760 = vpop.f32.mrb[0].mxu0
  %v761 = vpop.f32.mrb[0].mxu0
  %v762 = vpop.f32.mrb[0].mxu0
  %763 = vdwg.mxu0
  %766 = vrot.lane.b32.xlu0 %v711, 16
  %v767 = vpop.permute.xlu0 %766
  %768 = vrot.lane.b32.xlu0 %v759, 16
  %v769 = vpop.permute.xlu0 %768
  %v772 = vsel %vm318, %v487, %v767
  %v773 = vsel %vm318, %v535, %v769
  %v774 = vpack.c.bf16 %v773, %v772
  %v775 = vld [vmem:[%s3 + $0x3] sm:$0x1]
  %v776 = vlaneseq
  %v777 = vshrl.u32 %v776, 7
  %v778 = vsub.s32 0, %v777
  %v779 = vrot.slane %v775, %v778
  %780 = vrot.lane.b32.xlu0 %v265, 32
  %v781 = vpop.permute.xlu0 %780
  %782 = vrot.lane.b32.xlu0 %v266, 32
  %v783 = vpop.permute.xlu0 %782
  %v787 = vsel %vm161, %v774, 0
  %789 = vmatprep.subr.bf16.mxu0 0
  %790 = vmatpush1.bf16.msra.mxu0 %v781
  %791 = vmatprep.subr.bf16.mxu0 0
  %792 = vmatpush1.bf16.msra.mxu0 %v783
  %793 = vmatprep.subr.bf16.mxu0 0
  %794 = vmatpush1.bf16.msra.mxu0 0
  %795 = vmatprep.subr.bf16.mxu0 0
  %796 = vmatpush1.bf16.msra.mxu0 0
  %797 = vmatprep.subr.bf16.mxu0 0
  %798 = vmatpush1.bf16.msra.mxu0 0
  %799 = vmatprep.subr.bf16.mxu0 0
  %800 = vmatpush1.bf16.msra.mxu0 0
  %801 = vmatprep.subr.bf16.mxu0 0
  %802 = vmatpush1.bf16.msra.mxu0 0
  %803 = vmatprep.subr.bf16.mxu0 0
  %804 = vmatpush1.bf16.msra.mxu0 0
  %805 = vmatprep.subr.bf16.mxu0 0
  %806 = vmatpush1.bf16.msra.mxu0 0
  %807 = vmatprep.subr.bf16.mxu0 0
  %808 = vmatpush1.bf16.msra.mxu0 0
  %809 = vmatprep.subr.bf16.mxu0 0
  %810 = vmatpush1.bf16.msra.mxu0 0
  %811 = vmatprep.subr.bf16.mxu0 0
  %812 = vmatpush1.bf16.msra.mxu0 0
  %813 = vmatprep.subr.bf16.mxu0 0
  %814 = vmatpush1.bf16.msra.mxu0 0
  %815 = vmatprep.subr.bf16.mxu0 0
  %816 = vmatpush1.bf16.msra.mxu0 0
  %817 = vmatprep.subr.bf16.mxu0 0
  %818 = vmatpush1.bf16.msra.mxu0 0
  %819 = vmatprep.subr.bf16.mxu0 0
  %820 = vmatpush1.bf16.msra.mxu0 0
  %821 = vmatprep.mubr.bf16.mxu0 0
  %822 = vmatmul.mubr.bf16.gmra.mrb[0].mxu0 %v787
  %v823 = vpop.f32.mrb[0].mxu0
  %v824 = vadd.f32 %v779, %v823
  %v825 = vpop.f32.mrb[0].mxu0
  %v826 = vpop.f32.mrb[0].mxu0
  %v827 = vadd.f32 %v779, %v826
  %v828 = vpop.f32.mrb[0].mxu0
  %829 = vdwg.mxu0
  %v830 = vadd.f32 %v824, %v201
  %v831 = vadd.f32 %v827, %v202
  %v832 = vsel %vm161, %v830, 0.0
  %833 = vadd.xlane.f32.xlu0 %v832
  %v834 = vpop.xlane.xlu0 %833
  %v835 = vsel %vm161, %v831, 0.0
  %836 = vadd.xlane.f32.xlu0 %v835
  %v837 = vpop.xlane.xlu0 %836
  %v838 = vmul.f32 %v834, %v168
  %v839 = vmul.f32 %v837, %v168
  %v840 = vsub.f32 %v830, %v838
  %v841 = vsub.f32 %v831, %v839
  %v842 = vmul.f32 %v840, %v840
  %v843 = vmul.f32 %v841, %v841
  %v844 = vsel %vm161, %v842, 0.0
  %845 = vadd.xlane.f32.xlu0 %v844
  %v846 = vpop.xlane.xlu0 %845
  %v847 = vsel %vm161, %v843, 0.0
  %848 = vadd.xlane.f32.xlu0 %v847
  %v849 = vpop.xlane.xlu0 %848
  %v850 = vmul.f32 %v846, %v168
  %v851 = vmul.f32 %v849, %v168
  %v852 = vadd.f32 %v850, 1e-12
  %v853 = vadd.f32 %v851, 1e-12
  %v854 = vrsqrt.pop %v852
  %v855 = vrsqrt.pop %v853
  %v856 = vmul.f32 %v840, %v854
  %v857 = vmul.f32 %v841, %v855
  %v858 = vld [vmem:[%s3 + $0x4] sm:$0x1]
  %v859 = vlaneseq
  %v860 = vshrl.u32 %v859, 7
  %v861 = vsub.s32 0, %v860
  %v862 = vrot.slane %v858, %v861
  %v863 = vmul.f32 %v856, %v862
  %v864 = vmul.f32 %v857, %v862
  %v865 = vld [vmem:[%s3 + $0x5] sm:$0x1]
  %v866 = vlaneseq
  %v867 = vshrl.u32 %v866, 7
  %v868 = vsub.s32 0, %v867
  %v869 = vrot.slane %v865, %v868
  %v870 = vadd.f32 %v863, %v869
  %v871 = vadd.f32 %v864, %v869
  %v872 = vpack.c.bf16 %v871, %v870
  %v873 = vld [vmem:[%s3 + $0x6] sm:$0x1]
  %v874 = vlaneseq
  %v875 = vshrl.u32 %v874, 7
  %v876 = vsub.s32 0, %v875
  %v877 = vrot.slane %v873, %v876
  %v878 = vunpack.c.h.b16 %v239
  %v879 = vunpack.c.h.b16 %v240
  %v880 = vunpack.c.h.b16 %v241
  %v881 = vunpack.c.h.b16 %v242
  %v882 = vpack.c.b16 %v879, %v878
  %v883 = vpack.c.b16 %v881, %v880
  %v887 = vsel %vm161, %v872, 0
  %889 = vmatprep.subr.bf16.mxu0 0
  %890 = vmatpush1.bf16.msra.mxu0 %v882
  %891 = vmatprep.subr.bf16.mxu0 0
  %892 = vmatpush1.bf16.msra.mxu0 %v883
  %893 = vmatprep.subr.bf16.mxu0 0
  %894 = vmatpush1.bf16.msra.mxu0 0
  %895 = vmatprep.subr.bf16.mxu0 0
  %896 = vmatpush1.bf16.msra.mxu0 0
  %897 = vmatprep.subr.bf16.mxu0 0
  %898 = vmatpush1.bf16.msra.mxu0 0
  %899 = vmatprep.subr.bf16.mxu0 0
  %900 = vmatpush1.bf16.msra.mxu0 0
  %901 = vmatprep.subr.bf16.mxu0 0
  %902 = vmatpush1.bf16.msra.mxu0 0
  %903 = vmatprep.subr.bf16.mxu0 0
  %904 = vmatpush1.bf16.msra.mxu0 0
  %905 = vmatprep.subr.bf16.mxu0 0
  %906 = vmatpush1.bf16.msra.mxu0 0
  %907 = vmatprep.subr.bf16.mxu0 0
  %908 = vmatpush1.bf16.msra.mxu0 0
  %909 = vmatprep.subr.bf16.mxu0 0
  %910 = vmatpush1.bf16.msra.mxu0 0
  %911 = vmatprep.subr.bf16.mxu0 0
  %912 = vmatpush1.bf16.msra.mxu0 0
  %913 = vmatprep.subr.bf16.mxu0 0
  %914 = vmatpush1.bf16.msra.mxu0 0
  %915 = vmatprep.subr.bf16.mxu0 0
  %916 = vmatpush1.bf16.msra.mxu0 0
  %917 = vmatprep.subr.bf16.mxu0 0
  %918 = vmatpush1.bf16.msra.mxu0 0
  %919 = vmatprep.subr.bf16.mxu0 0
  %920 = vmatpush1.bf16.msra.mxu0 0
  %921 = vmatprep.mubr.bf16.mxu0 0
  %922 = vmatmul.mubr.bf16.gmra.mrb[0].mxu0 %v887
  %v923 = vpop.f32.mrb[0].mxu0
  %v924 = vadd.f32 %v877, %v923
  %v925 = vpop.f32.mrb[0].mxu0
  %v926 = vpop.f32.mrb[0].mxu0
  %v927 = vadd.f32 %v877, %v926
  %v928 = vpop.f32.mrb[0].mxu0
  %929 = vdwg.mxu0
  %v930 = vmul.f32 %v924, 0.5
  %v931 = vmul.f32 %v927, 0.5
  %v932 = vmul.f32 %v924, 0.70710677
  %v933 = vmul.f32 %v927, 0.70710677
  %v934 = vand.u32 2147483647, %v932
  %v935 = vand.u32 2147483647, %v933
  %v936 = vmul.f32 %v934, 0.3275911
  %v937 = vmul.f32 %v935, 0.3275911
  %v938 = vadd.f32 %v936, 1.0
  %v939 = vadd.f32 %v937, 1.0
  %v940 = vrcp.pop %v938
  %v941 = vmul.f32 1.0, %v940
  %v942 = vrcp.pop %v939
  %v943 = vmul.f32 1.0, %v942
  %v944 = vmul.f32 %v941, 1.0614054
  %v945 = vmul.f32 %v943, 1.0614054
  %v946 = vadd.f32 %v944, -1.4531521
  %v947 = vadd.f32 %v945, -1.4531521
  %v948 = vmul.f32 %v946, %v941
  %v949 = vmul.f32 %v947, %v943
  %v950 = vadd.f32 %v948, 1.4214138
  %v951 = vadd.f32 %v949, 1.4214138
  %v952 = vmul.f32 %v950, %v941
  %v953 = vmul.f32 %v951, %v943
  %v954 = vadd.f32 %v952, -0.28449672
  %v955 = vadd.f32 %v953, -0.28449672
  %v956 = vmul.f32 %v954, %v941
  %v957 = vmul.f32 %v955, %v943
  %v958 = vadd.f32 %v956, 0.2548296
  %v959 = vadd.f32 %v957, 0.2548296
  %v960 = vmul.f32 %v958, %v941
  %v961 = vmul.f32 %v959, %v943
  %v962 = vsub.f32 0.0, %v934
  %v963 = vsub.f32 0.0, %v935
  %v964 = vmul.f32 %v962, %v934
  %v965 = vmul.f32 %v963, %v935
  %v966 = vmul.f32 %v964, 1.442695
  %v967 = vpow.pop %v966
  %v968 = vmul.f32 %v965, 1.442695
  %v969 = vpow.pop %v968
  %v970 = vmul.f32 %v960, %v967
  %v971 = vmul.f32 %v961, %v969
  %v972 = vsub.f32 1.0, %v970
  %v973 = vsub.f32 1.0, %v971
  %vm974 = vcmp.ge.f32.partialorder %v932, 0.0
  %vm975 = vcmp.ge.f32.partialorder %v933, 0.0
  %v976 = vsub.f32 0.0, %v972
  %v977 = vsub.f32 0.0, %v973
  %v978 = vsel %vm974, %v972, %v976
  %v979 = vsel %vm975, %v973, %v977
  %v980 = vadd.f32 %v978, 1.0
  %v981 = vadd.f32 %v979, 1.0
  %v982 = vmul.f32 %v930, %v980
  %v983 = vmul.f32 %v931, %v981
  %v984 = vpack.c.bf16 %v983, %v982
  %v985 = vld [vmem:[%s3 + $0x7] sm:$0x1]
  %v986 = vlaneseq
  %v987 = vshrl.u32 %v986, 7
  %v988 = vsub.s32 0, %v987
  %v989 = vrot.slane %v985, %v988
  %v998 = vunpack.c.l.b16 %v243
  %v999 = vunpack.c.l.b16 %v244
  %v1000 = vunpack.c.l.b16 %v245
  %v1001 = vunpack.c.l.b16 %v246
  %v1002 = vunpack.c.l.b16 %v247
  %v1003 = vunpack.c.l.b16 %v248
  %v1004 = vunpack.c.l.b16 %v249
  %v1005 = vunpack.c.l.b16 %v250
  %v1006 = vpack.c.b16 %v999, %v998
  %v1007 = vpack.c.b16 %v1001, %v1000
  %v1008 = vpack.c.b16 %v1003, %v1002
  %v1009 = vpack.c.b16 %v1005, %v1004
  %vm1014 = vcmask 523264
  %v1016 = vsel %vm1014, %v984, 0
  %1018 = vmatprep.subr.bf16.mxu0 0
  %1019 = vmatpush1.bf16.msra.mxu0 %v1006
  %1020 = vmatprep.subr.bf16.mxu0 0
  %1021 = vmatpush1.bf16.msra.mxu0 %v1007
  %1022 = vmatprep.subr.bf16.mxu0 0
  %1023 = vmatpush1.bf16.msra.mxu0 %v1008
  %1024 = vmatprep.subr.bf16.mxu0 0
  %1025 = vmatpush1.bf16.msra.mxu0 %v1009
  %1026 = vmatprep.subr.bf16.mxu0 0
  %1027 = vmatpush1.bf16.msra.mxu0 0
  %1028 = vmatprep.subr.bf16.mxu0 0
  %1029 = vmatpush1.bf16.msra.mxu0 0
  %1030 = vmatprep.subr.bf16.mxu0 0
  %1031 = vmatpush1.bf16.msra.mxu0 0
  %1032 = vmatprep.subr.bf16.mxu0 0
  %1033 = vmatpush1.bf16.msra.mxu0 0
  %1034 = vmatprep.subr.bf16.mxu0 0
  %1035 = vmatpush1.bf16.msra.mxu0 0
  %1036 = vmatprep.subr.bf16.mxu0 0
  %1037 = vmatpush1.bf16.msra.mxu0 0
  %1038 = vmatprep.subr.bf16.mxu0 0
  %1039 = vmatpush1.bf16.msra.mxu0 0
  %1040 = vmatprep.subr.bf16.mxu0 0
  %1041 = vmatpush1.bf16.msra.mxu0 0
  %1042 = vmatprep.subr.bf16.mxu0 0
  %1043 = vmatpush1.bf16.msra.mxu0 0
  %1044 = vmatprep.subr.bf16.mxu0 0
  %1045 = vmatpush1.bf16.msra.mxu0 0
  %1046 = vmatprep.subr.bf16.mxu0 0
  %1047 = vmatpush1.bf16.msra.mxu0 0
  %1048 = vmatprep.subr.bf16.mxu0 0
  %1049 = vmatpush1.bf16.msra.mxu0 0
  %1050 = vmatprep.mubr.bf16.mxu0 0
  %1051 = vmatmul.mubr.bf16.gmra.mrb[0].mxu0 %v1016
  %v1052 = vpop.f32.mrb[0].mxu0
  %v1053 = vadd.f32 %v989, %v1052
  %v1054 = vpop.f32.mrb[0].mxu0
  %v1055 = vpop.f32.mrb[0].mxu0
  %v1056 = vadd.f32 %v989, %v1055
  %v1057 = vpop.f32.mrb[0].mxu0
  %1058 = vdwg.mxu0
  %v1059 = vadd.f32 %v1053, %v870
  %v1060 = vadd.f32 %v1056, %v871
  %v1061 = vsel %vm161, %v1059, 0.0
  %1062 = vadd.xlane.f32.xlu0 %v1061
  %v1063 = vpop.xlane.xlu0 %1062
  %v1064 = vsel %vm161, %v1060, 0.0
  %1065 = vadd.xlane.f32.xlu0 %v1064
  %v1066 = vpop.xlane.xlu0 %1065
  %v1067 = vmul.f32 %v1063, %v168
  %v1068 = vmul.f32 %v1066, %v168
  %v1069 = vsub.f32 %v1059, %v1067
  %v1070 = vsub.f32 %v1060, %v1068
  %v1071 = vmul.f32 %v1069, %v1069
  %v1072 = vmul.f32 %v1070, %v1070
  %v1073 = vsel %vm161, %v1071, 0.0
  %1074 = vadd.xlane.f32.xlu0 %v1073
  %v1075 = vpop.xlane.xlu0 %1074
  %v1076 = vsel %vm161, %v1072, 0.0
  %1077 = vadd.xlane.f32.xlu0 %v1076
  %v1078 = vpop.xlane.xlu0 %1077
  %v1079 = vmul.f32 %v1075, %v168
  %v1080 = vmul.f32 %v1078, %v168
  %v1081 = vadd.f32 %v1079, 1e-12
  %v1082 = vadd.f32 %v1080, 1e-12
  %v1083 = vrsqrt.pop %v1081
  %v1084 = vrsqrt.pop %v1082
  %v1085 = vmul.f32 %v1069, %v1083
  %v1086 = vmul.f32 %v1070, %v1084
  %v1087 = vld [vmem:[%s3 + $0x8] sm:$0x1]
  %v1088 = vlaneseq
  %v1089 = vshrl.u32 %v1088, 7
  %v1090 = vsub.s32 0, %v1089
  %v1091 = vrot.slane %v1087, %v1090
  %v1092 = vmul.f32 %v1085, %v1091
  %v1093 = vmul.f32 %v1086, %v1091
  %v1094 = vld [vmem:[%s3 + $0x9] sm:$0x1]
  %v1095 = vlaneseq
  %v1096 = vshrl.u32 %v1095, 7
  %v1097 = vsub.s32 0, %v1096
  %v1098 = vrot.slane %v1094, %v1097
  %v1099 = vadd.f32 %v1092, %v1098
  %v1100 = vadd.f32 %v1093, %v1098
  %s1101 = scalar_lea.vmem %s4, 32
  %v1102 = vld [vmem:[%s1101] sm:$0xff]
  %v1103 = vld [vmem:[%s1101 + $0x8] sm:$0xff]
  %v1104 = vld [vmem:[%s1101 + $0x10] sm:$0xff]
  %v1105 = vld [vmem:[%s1101 + $0x18] sm:$0xff]
  %s1106 = scalar_lea.vmem %s5, 32
  %v1107 = vld [vmem:[%s1106] sm:$0xf]
  %v1108 = vld [vmem:[%s1106 + $0x4] sm:$0xf]
  %v1109 = vld [vmem:[%s1106 + $0x8] sm:$0xf]
  %v1110 = vld [vmem:[%s1106 + $0xc] sm:$0xf]
  %v1111 = vld [vmem:[%s1106 + $0x10] sm:$0xf]
  %v1112 = vld [vmem:[%s1106 + $0x14] sm:$0xf]
  %v1113 = vld [vmem:[%s1106 + $0x18] sm:$0xf]
  %v1114 = vld [vmem:[%s1106 + $0x1c] sm:$0xf]
  %v1115 = vpack.c.bf16 %v1100, %v1099
  %v1116 = vld [vmem:[%s3 + $0xa] sm:$0x1]
  %v1117 = vlaneseq
  %v1118 = vshrl.u32 %v1117, 7
  %v1119 = vsub.s32 0, %v1118
  %v1120 = vrot.slane %v1116, %v1119
  %v1125 = vunpack.c.l.b16 %v1102
  %v1126 = vunpack.c.l.b16 %v1103
  %v1127 = vunpack.c.l.b16 %v1104
  %v1128 = vunpack.c.l.b16 %v1105
  %v1129 = vpack.c.b16 %v1126, %v1125
  %v1130 = vpack.c.b16 %v1128, %v1127
  %v1134 = vsel %vm161, %v1115, 0
  %1136 = vmatprep.subr.bf16.mxu0 0
  %1137 = vmatpush1.bf16.msra.mxu0 %v1129
  %1138 = vmatprep.subr.bf16.mxu0 0
  %1139 = vmatpush1.bf16.msra.mxu0 %v1130
  %1140 = vmatprep.subr.bf16.mxu0 0
  %1141 = vmatpush1.bf16.msra.mxu0 0
  %1142 = vmatprep.subr.bf16.mxu0 0
  %1143 = vmatpush1.bf16.msra.mxu0 0
  %1144 = vmatprep.subr.bf16.mxu0 0
  %1145 = vmatpush1.bf16.msra.mxu0 0
  %1146 = vmatprep.subr.bf16.mxu0 0
  %1147 = vmatpush1.bf16.msra.mxu0 0
  %1148 = vmatprep.subr.bf16.mxu0 0
  %1149 = vmatpush1.bf16.msra.mxu0 0
  %1150 = vmatprep.subr.bf16.mxu0 0
  %1151 = vmatpush1.bf16.msra.mxu0 0
  %1152 = vmatprep.subr.bf16.mxu0 0
  %1153 = vmatpush1.bf16.msra.mxu0 0
  %1154 = vmatprep.subr.bf16.mxu0 0
  %1155 = vmatpush1.bf16.msra.mxu0 0
  %1156 = vmatprep.subr.bf16.mxu0 0
  %1157 = vmatpush1.bf16.msra.mxu0 0
  %1158 = vmatprep.subr.bf16.mxu0 0
  %1159 = vmatpush1.bf16.msra.mxu0 0
  %1160 = vmatprep.subr.bf16.mxu0 0
  %1161 = vmatpush1.bf16.msra.mxu0 0
  %1162 = vmatprep.subr.bf16.mxu0 0
  %1163 = vmatpush1.bf16.msra.mxu0 0
  %1164 = vmatprep.subr.bf16.mxu0 0
  %1165 = vmatpush1.bf16.msra.mxu0 0
  %1166 = vmatprep.subr.bf16.mxu0 0
  %1167 = vmatpush1.bf16.msra.mxu0 0
  %1168 = vmatprep.mubr.bf16.mxu0 0
  %1169 = vmatmul.mubr.bf16.gmra.mrb[0].mxu0 %v1134
  %v1170 = vpop.f32.mrb[0].mxu0
  %v1171 = vadd.f32 %v1120, %v1170
  %v1172 = vpop.f32.mrb[0].mxu0
  %v1173 = vpop.f32.mrb[0].mxu0
  %v1174 = vadd.f32 %v1120, %v1173
  %v1175 = vpop.f32.mrb[0].mxu0
  %1176 = vdwg.mxu0
  %v1177 = vpack.c.bf16 %v1171, %v1171
  %v1178 = vpack.c.bf16 %v1174, %v1174
  %1180 = vrot.lane.b32.xlu0 %v1177, 96
  %v1181 = vpop.permute.xlu0 %1180
  %v1183 = vsel %vm318, %v1177, 0
  %v1186 = vsel %vm318, %v1181, 0
  %1188 = vmatprep.subr.bf16.mxu0 0
  %1189 = vmatpush1.bf16.xpose.msra.mxu0 %v1186
  %1190 = vmatprep.subr.bf16.mxu0 0
  %1191 = vmatpush1.bf16.xpose.msra.mxu0 0
  %1192 = vmatprep.subr.bf16.mxu0 0
  %1193 = vmatpush1.bf16.xpose.msra.mxu0 0
  %1194 = vmatprep.subr.bf16.mxu0 0
  %1195 = vmatpush1.bf16.xpose.msra.mxu0 0
  %1196 = vmatprep.subr.bf16.mxu0 0
  %1197 = vmatpush1.bf16.xpose.msra.mxu0 0
  %1198 = vmatprep.subr.bf16.mxu0 0
  %1199 = vmatpush1.bf16.xpose.msra.mxu0 0
  %1200 = vmatprep.subr.bf16.mxu0 0
  %1201 = vmatpush1.bf16.xpose.msra.mxu0 0
  %1202 = vmatprep.subr.bf16.mxu0 0
  %1203 = vmatpush1.bf16.xpose.msra.mxu0 0
  %1204 = vmatprep.subr.bf16.mxu0 0
  %1205 = vmatpush1.bf16.xpose.msra.mxu0 0
  %1206 = vmatprep.subr.bf16.mxu0 0
  %1207 = vmatpush1.bf16.xpose.msra.mxu0 0
  %1208 = vmatprep.subr.bf16.mxu0 0
  %1209 = vmatpush1.bf16.xpose.msra.mxu0 0
  %1210 = vmatprep.subr.bf16.mxu0 0
  %1211 = vmatpush1.bf16.xpose.msra.mxu0 0
  %1212 = vmatprep.subr.bf16.mxu0 0
  %1213 = vmatpush1.bf16.xpose.msra.mxu0 0
  %1214 = vmatprep.subr.bf16.mxu0 0
  %1215 = vmatpush1.bf16.xpose.msra.mxu0 0
  %1216 = vmatprep.subr.bf16.mxu0 0
  %1217 = vmatpush1.bf16.xpose.msra.mxu0 0
  %1218 = vmatprep.subr.bf16.mxu0 0
  %1219 = vmatpush1.bf16.xpose.msra.mxu0 0
  %1220 = vmatprep.mubr.bf16.mxu0 0
  %1221 = vmatmul.mubr.bf16.gmra.mrb[0].mxu0 %v1183
  %v1222 = vpop.f32.mrb[0].mxu0
  %v1223 = vadd.f32 0.0, %v1222
  %v1224 = vpop.f32.mrb[0].mxu0
  %v1225 = vpop.f32.mrb[0].mxu0
  %v1226 = vpop.f32.mrb[0].mxu0
  %1227 = vdwg.mxu0
  %1229 = vrot.lane.b32.xlu0 %v1178, 96
  %v1230 = vpop.permute.xlu0 %1229
  %v1232 = vsel %vm318, %v1178, 0
  %v1235 = vsel %vm318, %v1230, 0
  %1237 = vmatprep.subr.bf16.mxu0 0
  %1238 = vmatpush1.bf16.xpose.msra.mxu0 %v1235
  %1239 = vmatprep.subr.bf16.mxu0 0
  %1240 = vmatpush1.bf16.xpose.msra.mxu0 0
  %1241 = vmatprep.subr.bf16.mxu0 0
  %1242 = vmatpush1.bf16.xpose.msra.mxu0 0
  %1243 = vmatprep.subr.bf16.mxu0 0
  %1244 = vmatpush1.bf16.xpose.msra.mxu0 0
  %1245 = vmatprep.subr.bf16.mxu0 0
  %1246 = vmatpush1.bf16.xpose.msra.mxu0 0
  %1247 = vmatprep.subr.bf16.mxu0 0
  %1248 = vmatpush1.bf16.xpose.msra.mxu0 0
  %1249 = vmatprep.subr.bf16.mxu0 0
  %1250 = vmatpush1.bf16.xpose.msra.mxu0 0
  %1251 = vmatprep.subr.bf16.mxu0 0
  %1252 = vmatpush1.bf16.xpose.msra.mxu0 0
  %1253 = vmatprep.subr.bf16.mxu0 0
  %1254 = vmatpush1.bf16.xpose.msra.mxu0 0
  %1255 = vmatprep.subr.bf16.mxu0 0
  %1256 = vmatpush1.bf16.xpose.msra.mxu0 0
  %1257 = vmatprep.subr.bf16.mxu0 0
  %1258 = vmatpush1.bf16.xpose.msra.mxu0 0
  %1259 = vmatprep.subr.bf16.mxu0 0
  %1260 = vmatpush1.bf16.xpose.msra.mxu0 0
  %1261 = vmatprep.subr.bf16.mxu0 0
  %1262 = vmatpush1.bf16.xpose.msra.mxu0 0
  %1263 = vmatprep.subr.bf16.mxu0 0
  %1264 = vmatpush1.bf16.xpose.msra.mxu0 0
  %1265 = vmatprep.subr.bf16.mxu0 0
  %1266 = vmatpush1.bf16.xpose.msra.mxu0 0
  %1267 = vmatprep.subr.bf16.mxu0 0
  %1268 = vmatpush1.bf16.xpose.msra.mxu0 0
  %1269 = vmatprep.mubr.bf16.mxu0 0
  %1270 = vmatmul.mubr.bf16.gmra.mrb[0].mxu0 %v1232
  %v1271 = vpop.f32.mrb[0].mxu0
  %v1272 = vadd.f32 0.0, %v1271
  %v1273 = vpop.f32.mrb[0].mxu0
  %v1274 = vpop.f32.mrb[0].mxu0
  %v1275 = vpop.f32.mrb[0].mxu0
  %1276 = vdwg.mxu0
  %v1277 = vmul.f32 %v1223, 0.25
  %v1278 = vmul.f32 %v1272, 0.25
  %v1279 = vadd.f32 %v1277, %v232
  %v1280 = vadd.f32 %v1278, %v236
  %v1281 = vsel %vm418, %v1279, -inf
  %1282 = vmax.xlane.f32.xlu0 %v1281
  %v1283 = vpop.xlane.xlu0 %1282
  %v1284 = vsel %vm418, %v1280, -inf
  %1285 = vmax.xlane.f32.xlu0 %v1284
  %v1286 = vpop.xlane.xlu0 %1285
  %v1287 = vsub.f32 %v1279, %v1283
  %v1288 = vsub.f32 %v1280, %v1286
  %v1289 = vmul.f32 %v1287, 1.442695
  %v1290 = vpow.pop %v1289
  %v1291 = vmul.f32 %v1288, 1.442695
  %v1292 = vpow.pop %v1291
  %v1293 = vsel %vm418, %v1290, 0.0
  %1294 = vadd.xlane.f32.xlu0 %v1293
  %v1295 = vpop.xlane.xlu0 %1294
  %v1296 = vsel %vm418, %v1292, 0.0
  %1297 = vadd.xlane.f32.xlu0 %v1296
  %v1298 = vpop.xlane.xlu0 %1297
  %v1299 = vrcp.pop %v1295
  %v1300 = vrcp.pop %v1298
  %v1301 = vmul.f32 %v1290, %v1299
  %v1302 = vmul.f32 %v1292, %v1300
  %v1303 = vpack.c.bf16 %v1301, %v1301
  %v1304 = vpack.c.bf16 %v1302, %v1302
  %1305 = vrot.lane.b32.xlu0 %v1177, 64
  %v1306 = vpop.permute.xlu0 %1305
  %v1308 = vsel %vm418, %v1303, 0
  %v1311 = vsel %vm448, %v1306, 0
  %1313 = vmatprep.subr.bf16.mxu0 0
  %1314 = vmatpush1.bf16.msra.mxu0 %v1311
  %1315 = vmatprep.subr.bf16.mxu0 0
  %1316 = vmatpush1.bf16.msra.mxu0 0
  %1317 = vmatprep.subr.bf16.mxu0 0
  %1318 = vmatpush1.bf16.msra.mxu0 0
  %1319 = vmatprep.subr.bf16.mxu0 0
  %1320 = vmatpush1.bf16.msra.mxu0 0
  %1321 = vmatprep.subr.bf16.mxu0 0
  %1322 = vmatpush1.bf16.msra.mxu0 0
  %1323 = vmatprep.subr.bf16.mxu0 0
  %1324 = vmatpush1.bf16.msra.mxu0 0
  %1325 = vmatprep.subr.bf16.mxu0 0
  %1326 = vmatpush1.bf16.msra.mxu0 0
  %1327 = vmatprep.subr.bf16.mxu0 0
  %1328 = vmatpush1.bf16.msra.mxu0 0
  %1329 = vmatprep.subr.bf16.mxu0 0
  %1330 = vmatpush1.bf16.msra.mxu0 0
  %1331 = vmatprep.subr.bf16.mxu0 0
  %1332 = vmatpush1.bf16.msra.mxu0 0
  %1333 = vmatprep.subr.bf16.mxu0 0
  %1334 = vmatpush1.bf16.msra.mxu0 0
  %1335 = vmatprep.subr.bf16.mxu0 0
  %1336 = vmatpush1.bf16.msra.mxu0 0
  %1337 = vmatprep.subr.bf16.mxu0 0
  %1338 = vmatpush1.bf16.msra.mxu0 0
  %1339 = vmatprep.subr.bf16.mxu0 0
  %1340 = vmatpush1.bf16.msra.mxu0 0
  %1341 = vmatprep.subr.bf16.mxu0 0
  %1342 = vmatpush1.bf16.msra.mxu0 0
  %1343 = vmatprep.subr.bf16.mxu0 0
  %1344 = vmatpush1.bf16.msra.mxu0 0
  %1345 = vmatprep.mubr.bf16.mxu0 0
  %1346 = vmatmul.mubr.bf16.gmra.mrb[0].mxu0 %v1308
  %v1347 = vpop.f32.mrb[0].mxu0
  %v1348 = vadd.f32 0.0, %v1347
  %v1349 = vpop.f32.mrb[0].mxu0
  %v1350 = vpop.f32.mrb[0].mxu0
  %v1351 = vpop.f32.mrb[0].mxu0
  %1352 = vdwg.mxu0
  %1353 = vrot.lane.b32.xlu0 %v1178, 64
  %v1354 = vpop.permute.xlu0 %1353
  %v1356 = vsel %vm418, %v1304, 0
  %v1359 = vsel %vm448, %v1354, 0
  %1361 = vmatprep.subr.bf16.mxu0 0
  %1362 = vmatpush1.bf16.msra.mxu0 %v1359
  %1363 = vmatprep.subr.bf16.mxu0 0
  %1364 = vmatpush1.bf16.msra.mxu0 0
  %1365 = vmatprep.subr.bf16.mxu0 0
  %1366 = vmatpush1.bf16.msra.mxu0 0
  %1367 = vmatprep.subr.bf16.mxu0 0
  %1368 = vmatpush1.bf16.msra.mxu0 0
  %1369 = vmatprep.subr.bf16.mxu0 0
  %1370 = vmatpush1.bf16.msra.mxu0 0
  %1371 = vmatprep.subr.bf16.mxu0 0
  %1372 = vmatpush1.bf16.msra.mxu0 0
  %1373 = vmatprep.subr.bf16.mxu0 0
  %1374 = vmatpush1.bf16.msra.mxu0 0
  %1375 = vmatprep.subr.bf16.mxu0 0
  %1376 = vmatpush1.bf16.msra.mxu0 0
  %1377 = vmatprep.subr.bf16.mxu0 0
  %1378 = vmatpush1.bf16.msra.mxu0 0
  %1379 = vmatprep.subr.bf16.mxu0 0
  %1380 = vmatpush1.bf16.msra.mxu0 0
  %1381 = vmatprep.subr.bf16.mxu0 0
  %1382 = vmatpush1.bf16.msra.mxu0 0
  %1383 = vmatprep.subr.bf16.mxu0 0
  %1384 = vmatpush1.bf16.msra.mxu0 0
  %1385 = vmatprep.subr.bf16.mxu0 0
  %1386 = vmatpush1.bf16.msra.mxu0 0
  %1387 = vmatprep.subr.bf16.mxu0 0
  %1388 = vmatpush1.bf16.msra.mxu0 0
  %1389 = vmatprep.subr.bf16.mxu0 0
  %1390 = vmatpush1.bf16.msra.mxu0 0
  %1391 = vmatprep.subr.bf16.mxu0 0
  %1392 = vmatpush1.bf16.msra.mxu0 0
  %1393 = vmatprep.mubr.bf16.mxu0 0
  %1394 = vmatmul.mubr.bf16.gmra.mrb[0].mxu0 %v1356
  %v1395 = vpop.f32.mrb[0].mxu0
  %v1396 = vadd.f32 0.0, %v1395
  %v1397 = vpop.f32.mrb[0].mxu0
  %v1398 = vpop.f32.mrb[0].mxu0
  %v1399 = vpop.f32.mrb[0].mxu0
  %1400 = vdwg.mxu0
  %1401 = vrot.lane.b32.xlu0 %v1177, 112
  %v1402 = vpop.permute.xlu0 %1401
  %1403 = vrot.lane.b32.xlu0 %v1177, 80
  %v1404 = vpop.permute.xlu0 %1403
  %v1406 = vsel %vm318, %v1402, 0
  %v1409 = vsel %vm318, %v1404, 0
  %1411 = vmatprep.subr.bf16.mxu0 0
  %1412 = vmatpush1.bf16.xpose.msra.mxu0 %v1409
  %1413 = vmatprep.subr.bf16.mxu0 0
  %1414 = vmatpush1.bf16.xpose.msra.mxu0 0
  %1415 = vmatprep.subr.bf16.mxu0 0
  %1416 = vmatpush1.bf16.xpose.msra.mxu0 0
  %1417 = vmatprep.subr.bf16.mxu0 0
  %1418 = vmatpush1.bf16.xpose.msra.mxu0 0
  %1419 = vmatprep.subr.bf16.mxu0 0
  %1420 = vmatpush1.bf16.xpose.msra.mxu0 0
  %1421 = vmatprep.subr.bf16.mxu0 0
  %1422 = vmatpush1.bf16.xpose.msra.mxu0 0
  %1423 = vmatprep.subr.bf16.mxu0 0
  %1424 = vmatpush1.bf16.xpose.msra.mxu0 0
  %1425 = vmatprep.subr.bf16.mxu0 0
  %1426 = vmatpush1.bf16.xpose.msra.mxu0 0
  %1427 = vmatprep.subr.bf16.mxu0 0
  %1428 = vmatpush1.bf16.xpose.msra.mxu0 0
  %1429 = vmatprep.subr.bf16.mxu0 0
  %1430 = vmatpush1.bf16.xpose.msra.mxu0 0
  %1431 = vmatprep.subr.bf16.mxu0 0
  %1432 = vmatpush1.bf16.xpose.msra.mxu0 0
  %1433 = vmatprep.subr.bf16.mxu0 0
  %1434 = vmatpush1.bf16.xpose.msra.mxu0 0
  %1435 = vmatprep.subr.bf16.mxu0 0
  %1436 = vmatpush1.bf16.xpose.msra.mxu0 0
  %1437 = vmatprep.subr.bf16.mxu0 0
  %1438 = vmatpush1.bf16.xpose.msra.mxu0 0
  %1439 = vmatprep.subr.bf16.mxu0 0
  %1440 = vmatpush1.bf16.xpose.msra.mxu0 0
  %1441 = vmatprep.subr.bf16.mxu0 0
  %1442 = vmatpush1.bf16.xpose.msra.mxu0 0
  %1443 = vmatprep.mubr.bf16.mxu0 0
  %1444 = vmatmul.mubr.bf16.gmra.mrb[0].mxu0 %v1406
  %v1445 = vpop.f32.mrb[0].mxu0
  %v1446 = vadd.f32 0.0, %v1445
  %v1447 = vpop.f32.mrb[0].mxu0
  %v1448 = vpop.f32.mrb[0].mxu0
  %v1449 = vpop.f32.mrb[0].mxu0
  %1450 = vdwg.mxu0
  %1451 = vrot.lane.b32.xlu0 %v1178, 112
  %v1452 = vpop.permute.xlu0 %1451
  %1453 = vrot.lane.b32.xlu0 %v1178, 80
  %v1454 = vpop.permute.xlu0 %1453
  %v1456 = vsel %vm318, %v1452, 0
  %v1459 = vsel %vm318, %v1454, 0
  %1461 = vmatprep.subr.bf16.mxu0 0
  %1462 = vmatpush1.bf16.xpose.msra.mxu0 %v1459
  %1463 = vmatprep.subr.bf16.mxu0 0
  %1464 = vmatpush1.bf16.xpose.msra.mxu0 0
  %1465 = vmatprep.subr.bf16.mxu0 0
  %1466 = vmatpush1.bf16.xpose.msra.mxu0 0
  %1467 = vmatprep.subr.bf16.mxu0 0
  %1468 = vmatpush1.bf16.xpose.msra.mxu0 0
  %1469 = vmatprep.subr.bf16.mxu0 0
  %1470 = vmatpush1.bf16.xpose.msra.mxu0 0
  %1471 = vmatprep.subr.bf16.mxu0 0
  %1472 = vmatpush1.bf16.xpose.msra.mxu0 0
  %1473 = vmatprep.subr.bf16.mxu0 0
  %1474 = vmatpush1.bf16.xpose.msra.mxu0 0
  %1475 = vmatprep.subr.bf16.mxu0 0
  %1476 = vmatpush1.bf16.xpose.msra.mxu0 0
  %1477 = vmatprep.subr.bf16.mxu0 0
  %1478 = vmatpush1.bf16.xpose.msra.mxu0 0
  %1479 = vmatprep.subr.bf16.mxu0 0
  %1480 = vmatpush1.bf16.xpose.msra.mxu0 0
  %1481 = vmatprep.subr.bf16.mxu0 0
  %1482 = vmatpush1.bf16.xpose.msra.mxu0 0
  %1483 = vmatprep.subr.bf16.mxu0 0
  %1484 = vmatpush1.bf16.xpose.msra.mxu0 0
  %1485 = vmatprep.subr.bf16.mxu0 0
  %1486 = vmatpush1.bf16.xpose.msra.mxu0 0
  %1487 = vmatprep.subr.bf16.mxu0 0
  %1488 = vmatpush1.bf16.xpose.msra.mxu0 0
  %1489 = vmatprep.subr.bf16.mxu0 0
  %1490 = vmatpush1.bf16.xpose.msra.mxu0 0
  %1491 = vmatprep.subr.bf16.mxu0 0
  %1492 = vmatpush1.bf16.xpose.msra.mxu0 0
  %1493 = vmatprep.mubr.bf16.mxu0 0
  %1494 = vmatmul.mubr.bf16.gmra.mrb[0].mxu0 %v1456
  %v1495 = vpop.f32.mrb[0].mxu0
  %v1496 = vadd.f32 0.0, %v1495
  %v1497 = vpop.f32.mrb[0].mxu0
  %v1498 = vpop.f32.mrb[0].mxu0
  %v1499 = vpop.f32.mrb[0].mxu0
  %1500 = vdwg.mxu0
  %v1501 = vmul.f32 %v1446, 0.25
  %v1502 = vmul.f32 %v1496, 0.25
  %v1503 = vadd.f32 %v1501, %v232
  %v1504 = vadd.f32 %v1502, %v236
  %v1505 = vsel %vm418, %v1503, -inf
  %1506 = vmax.xlane.f32.xlu0 %v1505
  %v1507 = vpop.xlane.xlu0 %1506
  %v1508 = vsel %vm418, %v1504, -inf
  %1509 = vmax.xlane.f32.xlu0 %v1508
  %v1510 = vpop.xlane.xlu0 %1509
  %v1511 = vsub.f32 %v1503, %v1507
  %v1512 = vsub.f32 %v1504, %v1510
  %v1513 = vmul.f32 %v1511, 1.442695
  %v1514 = vpow.pop %v1513
  %v1515 = vmul.f32 %v1512, 1.442695
  %v1516 = vpow.pop %v1515
  %v1517 = vsel %vm418, %v1514, 0.0
  %1518 = vadd.xlane.f32.xlu0 %v1517
  %v1519 = vpop.xlane.xlu0 %1518
  %v1520 = vsel %vm418, %v1516, 0.0
  %1521 = vadd.xlane.f32.xlu0 %v1520
  %v1522 = vpop.xlane.xlu0 %1521
  %v1523 = vrcp.pop %v1519
  %v1524 = vrcp.pop %v1522
  %v1525 = vmul.f32 %v1514, %v1523
  %v1526 = vmul.f32 %v1516, %v1524
  %v1527 = vpack.c.bf16 %v1525, %v1525
  %v1528 = vpack.c.bf16 %v1526, %v1526
  %1529 = vrot.lane.b32.xlu0 %v1177, 48
  %v1530 = vpop.permute.xlu0 %1529
  %v1532 = vsel %vm418, %v1527, 0
  %v1535 = vsel %vm448, %v1530, 0
  %1537 = vmatprep.subr.bf16.mxu0 0
  %1538 = vmatpush1.bf16.msra.mxu0 %v1535
  %1539 = vmatprep.subr.bf16.mxu0 0
  %1540 = vmatpush1.bf16.msra.mxu0 0
  %1541 = vmatprep.subr.bf16.mxu0 0
  %1542 = vmatpush1.bf16.msra.mxu0 0
  %1543 = vmatprep.subr.bf16.mxu0 0
  %1544 = vmatpush1.bf16.msra.mxu0 0
  %1545 = vmatprep.subr.bf16.mxu0 0
  %1546 = vmatpush1.bf16.msra.mxu0 0
  %1547 = vmatprep.subr.bf16.mxu0 0
  %1548 = vmatpush1.bf16.msra.mxu0 0
  %1549 = vmatprep.subr.bf16.mxu0 0
  %1550 = vmatpush1.bf16.msra.mxu0 0
  %1551 = vmatprep.subr.bf16.mxu0 0
  %1552 = vmatpush1.bf16.msra.mxu0 0
  %1553 = vmatprep.subr.bf16.mxu0 0
  %1554 = vmatpush1.bf16.msra.mxu0 0
  %1555 = vmatprep.subr.bf16.mxu0 0
  %1556 = vmatpush1.bf16.msra.mxu0 0
  %1557 = vmatprep.subr.bf16.mxu0 0
  %1558 = vmatpush1.bf16.msra.mxu0 0
  %1559 = vmatprep.subr.bf16.mxu0 0
  %1560 = vmatpush1.bf16.msra.mxu0 0
  %1561 = vmatprep.subr.bf16.mxu0 0
  %1562 = vmatpush1.bf16.msra.mxu0 0
  %1563 = vmatprep.subr.bf16.mxu0 0
  %1564 = vmatpush1.bf16.msra.mxu0 0
  %1565 = vmatprep.subr.bf16.mxu0 0
  %1566 = vmatpush1.bf16.msra.mxu0 0
  %1567 = vmatprep.subr.bf16.mxu0 0
  %1568 = vmatpush1.bf16.msra.mxu0 0
  %1569 = vmatprep.mubr.bf16.mxu0 0
  %1570 = vmatmul.mubr.bf16.gmra.mrb[0].mxu0 %v1532
  %v1571 = vpop.f32.mrb[0].mxu0
  %v1572 = vadd.f32 0.0, %v1571
  %v1573 = vpop.f32.mrb[0].mxu0
  %v1574 = vpop.f32.mrb[0].mxu0
  %v1575 = vpop.f32.mrb[0].mxu0
  %1576 = vdwg.mxu0
  %1577 = vrot.lane.b32.xlu0 %v1178, 48
  %v1578 = vpop.permute.xlu0 %1577
  %v1580 = vsel %vm418, %v1528, 0
  %v1583 = vsel %vm448, %v1578, 0
  %1585 = vmatprep.subr.bf16.mxu0 0
  %1586 = vmatpush1.bf16.msra.mxu0 %v1583
  %1587 = vmatprep.subr.bf16.mxu0 0
  %1588 = vmatpush1.bf16.msra.mxu0 0
  %1589 = vmatprep.subr.bf16.mxu0 0
  %1590 = vmatpush1.bf16.msra.mxu0 0
  %1591 = vmatprep.subr.bf16.mxu0 0
  %1592 = vmatpush1.bf16.msra.mxu0 0
  %1593 = vmatprep.subr.bf16.mxu0 0
  %1594 = vmatpush1.bf16.msra.mxu0 0
  %1595 = vmatprep.subr.bf16.mxu0 0
  %1596 = vmatpush1.bf16.msra.mxu0 0
  %1597 = vmatprep.subr.bf16.mxu0 0
  %1598 = vmatpush1.bf16.msra.mxu0 0
  %1599 = vmatprep.subr.bf16.mxu0 0
  %1600 = vmatpush1.bf16.msra.mxu0 0
  %1601 = vmatprep.subr.bf16.mxu0 0
  %1602 = vmatpush1.bf16.msra.mxu0 0
  %1603 = vmatprep.subr.bf16.mxu0 0
  %1604 = vmatpush1.bf16.msra.mxu0 0
  %1605 = vmatprep.subr.bf16.mxu0 0
  %1606 = vmatpush1.bf16.msra.mxu0 0
  %1607 = vmatprep.subr.bf16.mxu0 0
  %1608 = vmatpush1.bf16.msra.mxu0 0
  %1609 = vmatprep.subr.bf16.mxu0 0
  %1610 = vmatpush1.bf16.msra.mxu0 0
  %1611 = vmatprep.subr.bf16.mxu0 0
  %1612 = vmatpush1.bf16.msra.mxu0 0
  %1613 = vmatprep.subr.bf16.mxu0 0
  %1614 = vmatpush1.bf16.msra.mxu0 0
  %1615 = vmatprep.subr.bf16.mxu0 0
  %1616 = vmatpush1.bf16.msra.mxu0 0
  %1617 = vmatprep.mubr.bf16.mxu0 0
  %1618 = vmatmul.mubr.bf16.gmra.mrb[0].mxu0 %v1580
  %v1619 = vpop.f32.mrb[0].mxu0
  %v1620 = vadd.f32 0.0, %v1619
  %v1621 = vpop.f32.mrb[0].mxu0
  %v1622 = vpop.f32.mrb[0].mxu0
  %v1623 = vpop.f32.mrb[0].mxu0
  %1624 = vdwg.mxu0
  %1627 = vrot.lane.b32.xlu0 %v1572, 16
  %v1628 = vpop.permute.xlu0 %1627
  %1629 = vrot.lane.b32.xlu0 %v1620, 16
  %v1630 = vpop.permute.xlu0 %1629
  %v1633 = vsel %vm318, %v1348, %v1628
  %v1634 = vsel %vm318, %v1396, %v1630
  %v1635 = vpack.c.bf16 %v1634, %v1633
  %v1636 = vld [vmem:[%s3 + $0xb] sm:$0x1]
  %v1637 = vlaneseq
  %v1638 = vshrl.u32 %v1637, 7
  %v1639 = vsub.s32 0, %v1638
  %v1640 = vrot.slane %v1636, %v1639
  %1641 = vrot.lane.b32.xlu0 %v1129, 32
  %v1642 = vpop.permute.xlu0 %1641
  %1643 = vrot.lane.b32.xlu0 %v1130, 32
  %v1644 = vpop.permute.xlu0 %1643
  %v1648 = vsel %vm161, %v1635, 0
  %1650 = vmatprep.subr.bf16.mxu0 0
  %1651 = vmatpush1.bf16.msra.mxu0 %v1642
  %1652 = vmatprep.subr.bf16.mxu0 0
  %1653 = vmatpush1.bf16.msra.mxu0 %v1644
  %1654 = vmatprep.subr.bf16.mxu0 0
  %1655 = vmatpush1.bf16.msra.mxu0 0
  %1656 = vmatprep.subr.bf16.mxu0 0
  %1657 = vmatpush1.bf16.msra.mxu0 0
  %1658 = vmatprep.subr.bf16.mxu0 0
  %1659 = vmatpush1.bf16.msra.mxu0 0
  %1660 = vmatprep.subr.bf16.mxu0 0
  %1661 = vmatpush1.bf16.msra.mxu0 0
  %1662 = vmatprep.subr.bf16.mxu0 0
  %1663 = vmatpush1.bf16.msra.mxu0 0
  %1664 = vmatprep.subr.bf16.mxu0 0
  %1665 = vmatpush1.bf16.msra.mxu0 0
  %1666 = vmatprep.subr.bf16.mxu0 0
  %1667 = vmatpush1.bf16.msra.mxu0 0
  %1668 = vmatprep.subr.bf16.mxu0 0
  %1669 = vmatpush1.bf16.msra.mxu0 0
  %1670 = vmatprep.subr.bf16.mxu0 0
  %1671 = vmatpush1.bf16.msra.mxu0 0
  %1672 = vmatprep.subr.bf16.mxu0 0
  %1673 = vmatpush1.bf16.msra.mxu0 0
  %1674 = vmatprep.subr.bf16.mxu0 0
  %1675 = vmatpush1.bf16.msra.mxu0 0
  %1676 = vmatprep.subr.bf16.mxu0 0
  %1677 = vmatpush1.bf16.msra.mxu0 0
  %1678 = vmatprep.subr.bf16.mxu0 0
  %1679 = vmatpush1.bf16.msra.mxu0 0
  %1680 = vmatprep.subr.bf16.mxu0 0
  %1681 = vmatpush1.bf16.msra.mxu0 0
  %1682 = vmatprep.mubr.bf16.mxu0 0
  %1683 = vmatmul.mubr.bf16.gmra.mrb[0].mxu0 %v1648
  %v1684 = vpop.f32.mrb[0].mxu0
  %v1685 = vadd.f32 %v1640, %v1684
  %v1686 = vpop.f32.mrb[0].mxu0
  %v1687 = vpop.f32.mrb[0].mxu0
  %v1688 = vadd.f32 %v1640, %v1687
  %v1689 = vpop.f32.mrb[0].mxu0
  %1690 = vdwg.mxu0
  %v1691 = vadd.f32 %v1685, %v1099
  %v1692 = vadd.f32 %v1688, %v1100
  %v1693 = vsel %vm161, %v1691, 0.0
  %1694 = vadd.xlane.f32.xlu0 %v1693
  %v1695 = vpop.xlane.xlu0 %1694
  %v1696 = vsel %vm161, %v1692, 0.0
  %1697 = vadd.xlane.f32.xlu0 %v1696
  %v1698 = vpop.xlane.xlu0 %1697
  %v1699 = vmul.f32 %v1695, %v168
  %v1700 = vmul.f32 %v1698, %v168
  %v1701 = vsub.f32 %v1691, %v1699
  %v1702 = vsub.f32 %v1692, %v1700
  %v1703 = vmul.f32 %v1701, %v1701
  %v1704 = vmul.f32 %v1702, %v1702
  %v1705 = vsel %vm161, %v1703, 0.0
  %1706 = vadd.xlane.f32.xlu0 %v1705
  %v1707 = vpop.xlane.xlu0 %1706
  %v1708 = vsel %vm161, %v1704, 0.0
  %1709 = vadd.xlane.f32.xlu0 %v1708
  %v1710 = vpop.xlane.xlu0 %1709
  %v1711 = vmul.f32 %v1707, %v168
  %v1712 = vmul.f32 %v1710, %v168
  %v1713 = vadd.f32 %v1711, 1e-12
  %v1714 = vadd.f32 %v1712, 1e-12
  %v1715 = vrsqrt.pop %v1713
  %v1716 = vrsqrt.pop %v1714
  %v1717 = vmul.f32 %v1701, %v1715
  %v1718 = vmul.f32 %v1702, %v1716
  %v1719 = vld [vmem:[%s3 + $0xc] sm:$0x1]
  %v1720 = vlaneseq
  %v1721 = vshrl.u32 %v1720, 7
  %v1722 = vsub.s32 0, %v1721
  %v1723 = vrot.slane %v1719, %v1722
  %v1724 = vmul.f32 %v1717, %v1723
  %v1725 = vmul.f32 %v1718, %v1723
  %v1726 = vld [vmem:[%s3 + $0xd] sm:$0x1]
  %v1727 = vlaneseq
  %v1728 = vshrl.u32 %v1727, 7
  %v1729 = vsub.s32 0, %v1728
  %v1730 = vrot.slane %v1726, %v1729
  %v1731 = vadd.f32 %v1724, %v1730
  %v1732 = vadd.f32 %v1725, %v1730
  %v1733 = vpack.c.bf16 %v1732, %v1731
  %v1734 = vld [vmem:[%s3 + $0xe] sm:$0x1]
  %v1735 = vlaneseq
  %v1736 = vshrl.u32 %v1735, 7
  %v1737 = vsub.s32 0, %v1736
  %v1738 = vrot.slane %v1734, %v1737
  %v1739 = vunpack.c.h.b16 %v1102
  %v1740 = vunpack.c.h.b16 %v1103
  %v1741 = vunpack.c.h.b16 %v1104
  %v1742 = vunpack.c.h.b16 %v1105
  %v1743 = vpack.c.b16 %v1740, %v1739
  %v1744 = vpack.c.b16 %v1742, %v1741
  %v1748 = vsel %vm161, %v1733, 0
  %1750 = vmatprep.subr.bf16.mxu0 0
  %1751 = vmatpush1.bf16.msra.mxu0 %v1743
  %1752 = vmatprep.subr.bf16.mxu0 0
  %1753 = vmatpush1.bf16.msra.mxu0 %v1744
  %1754 = vmatprep.subr.bf16.mxu0 0
  %1755 = vmatpush1.bf16.msra.mxu0 0
  %1756 = vmatprep.subr.bf16.mxu0 0
  %1757 = vmatpush1.bf16.msra.mxu0 0
  %1758 = vmatprep.subr.bf16.mxu0 0
  %1759 = vmatpush1.bf16.msra.mxu0 0
  %1760 = vmatprep.subr.bf16.mxu0 0
  %1761 = vmatpush1.bf16.msra.mxu0 0
  %1762 = vmatprep.subr.bf16.mxu0 0
  %1763 = vmatpush1.bf16.msra.mxu0 0
  %1764 = vmatprep.subr.bf16.mxu0 0
  %1765 = vmatpush1.bf16.msra.mxu0 0
  %1766 = vmatprep.subr.bf16.mxu0 0
  %1767 = vmatpush1.bf16.msra.mxu0 0
  %1768 = vmatprep.subr.bf16.mxu0 0
  %1769 = vmatpush1.bf16.msra.mxu0 0
  %1770 = vmatprep.subr.bf16.mxu0 0
  %1771 = vmatpush1.bf16.msra.mxu0 0
  %1772 = vmatprep.subr.bf16.mxu0 0
  %1773 = vmatpush1.bf16.msra.mxu0 0
  %1774 = vmatprep.subr.bf16.mxu0 0
  %1775 = vmatpush1.bf16.msra.mxu0 0
  %1776 = vmatprep.subr.bf16.mxu0 0
  %1777 = vmatpush1.bf16.msra.mxu0 0
  %1778 = vmatprep.subr.bf16.mxu0 0
  %1779 = vmatpush1.bf16.msra.mxu0 0
  %1780 = vmatprep.subr.bf16.mxu0 0
  %1781 = vmatpush1.bf16.msra.mxu0 0
  %1782 = vmatprep.mubr.bf16.mxu0 0
  %1783 = vmatmul.mubr.bf16.gmra.mrb[0].mxu0 %v1748
  %v1784 = vpop.f32.mrb[0].mxu0
  %v1785 = vadd.f32 %v1738, %v1784
  %v1786 = vpop.f32.mrb[0].mxu0
  %v1787 = vpop.f32.mrb[0].mxu0
  %v1788 = vadd.f32 %v1738, %v1787
  %v1789 = vpop.f32.mrb[0].mxu0
  %1790 = vdwg.mxu0
  %v1791 = vmul.f32 %v1785, 0.5
  %v1792 = vmul.f32 %v1788, 0.5
  %v1793 = vmul.f32 %v1785, 0.70710677
  %v1794 = vmul.f32 %v1788, 0.70710677
  %v1795 = vand.u32 2147483647, %v1793
  %v1796 = vand.u32 2147483647, %v1794
  %v1797 = vmul.f32 %v1795, 0.3275911
  %v1798 = vmul.f32 %v1796, 0.3275911
  %v1799 = vadd.f32 %v1797, 1.0
  %v1800 = vadd.f32 %v1798, 1.0
  %v1801 = vrcp.pop %v1799
  %v1802 = vmul.f32 1.0, %v1801
  %v1803 = vrcp.pop %v1800
  %v1804 = vmul.f32 1.0, %v1803
  %v1805 = vmul.f32 %v1802, 1.0614054
  %v1806 = vmul.f32 %v1804, 1.0614054
  %v1807 = vadd.f32 %v1805, -1.4531521
  %v1808 = vadd.f32 %v1806, -1.4531521
  %v1809 = vmul.f32 %v1807, %v1802
  %v1810 = vmul.f32 %v1808, %v1804
  %v1811 = vadd.f32 %v1809, 1.4214138
  %v1812 = vadd.f32 %v1810, 1.4214138
  %v1813 = vmul.f32 %v1811, %v1802
  %v1814 = vmul.f32 %v1812, %v1804
  %v1815 = vadd.f32 %v1813, -0.28449672
  %v1816 = vadd.f32 %v1814, -0.28449672
  %v1817 = vmul.f32 %v1815, %v1802
  %v1818 = vmul.f32 %v1816, %v1804
  %v1819 = vadd.f32 %v1817, 0.2548296
  %v1820 = vadd.f32 %v1818, 0.2548296
  %v1821 = vmul.f32 %v1819, %v1802
  %v1822 = vmul.f32 %v1820, %v1804
  %v1823 = vsub.f32 0.0, %v1795
  %v1824 = vsub.f32 0.0, %v1796
  %v1825 = vmul.f32 %v1823, %v1795
  %v1826 = vmul.f32 %v1824, %v1796
  %v1827 = vmul.f32 %v1825, 1.442695
  %v1828 = vpow.pop %v1827
  %v1829 = vmul.f32 %v1826, 1.442695
  %v1830 = vpow.pop %v1829
  %v1831 = vmul.f32 %v1821, %v1828
  %v1832 = vmul.f32 %v1822, %v1830
  %v1833 = vsub.f32 1.0, %v1831
  %v1834 = vsub.f32 1.0, %v1832
  %vm1835 = vcmp.ge.f32.partialorder %v1793, 0.0
  %vm1836 = vcmp.ge.f32.partialorder %v1794, 0.0
  %v1837 = vsub.f32 0.0, %v1833
  %v1838 = vsub.f32 0.0, %v1834
  %v1839 = vsel %vm1835, %v1833, %v1837
  %v1840 = vsel %vm1836, %v1834, %v1838
  %v1841 = vadd.f32 %v1839, 1.0
  %v1842 = vadd.f32 %v1840, 1.0
  %v1843 = vmul.f32 %v1791, %v1841
  %v1844 = vmul.f32 %v1792, %v1842
  %v1845 = vpack.c.bf16 %v1844, %v1843
  %v1846 = vld [vmem:[%s3 + $0xf] sm:$0x1]
  %v1847 = vlaneseq
  %v1848 = vshrl.u32 %v1847, 7
  %v1849 = vsub.s32 0, %v1848
  %v1850 = vrot.slane %v1846, %v1849
  %v1859 = vunpack.c.l.b16 %v1107
  %v1860 = vunpack.c.l.b16 %v1108
  %v1861 = vunpack.c.l.b16 %v1109
  %v1862 = vunpack.c.l.b16 %v1110
  %v1863 = vunpack.c.l.b16 %v1111
  %v1864 = vunpack.c.l.b16 %v1112
  %v1865 = vunpack.c.l.b16 %v1113
  %v1866 = vunpack.c.l.b16 %v1114
  %v1867 = vpack.c.b16 %v1860, %v1859
  %v1868 = vpack.c.b16 %v1862, %v1861
  %v1869 = vpack.c.b16 %v1864, %v1863
  %v1870 = vpack.c.b16 %v1866, %v1865
  %v1876 = vsel %vm1014, %v1845, 0
  %1878 = vmatprep.subr.bf16.mxu0 0
  %1879 = vmatpush1.bf16.msra.mxu0 %v1867
  %1880 = vmatprep.subr.bf16.mxu0 0
  %1881 = vmatpush1.bf16.msra.mxu0 %v1868
  %1882 = vmatprep.subr.bf16.mxu0 0
  %1883 = vmatpush1.bf16.msra.mxu0 %v1869
  %1884 = vmatprep.subr.bf16.mxu0 0
  %1885 = vmatpush1.bf16.msra.mxu0 %v1870
  %1886 = vmatprep.subr.bf16.mxu0 0
  %1887 = vmatpush1.bf16.msra.mxu0 0
  %1888 = vmatprep.subr.bf16.mxu0 0
  %1889 = vmatpush1.bf16.msra.mxu0 0
  %1890 = vmatprep.subr.bf16.mxu0 0
  %1891 = vmatpush1.bf16.msra.mxu0 0
  %1892 = vmatprep.subr.bf16.mxu0 0
  %1893 = vmatpush1.bf16.msra.mxu0 0
  %1894 = vmatprep.subr.bf16.mxu0 0
  %1895 = vmatpush1.bf16.msra.mxu0 0
  %1896 = vmatprep.subr.bf16.mxu0 0
  %1897 = vmatpush1.bf16.msra.mxu0 0
  %1898 = vmatprep.subr.bf16.mxu0 0
  %1899 = vmatpush1.bf16.msra.mxu0 0
  %1900 = vmatprep.subr.bf16.mxu0 0
  %1901 = vmatpush1.bf16.msra.mxu0 0
  %1902 = vmatprep.subr.bf16.mxu0 0
  %1903 = vmatpush1.bf16.msra.mxu0 0
  %1904 = vmatprep.subr.bf16.mxu0 0
  %1905 = vmatpush1.bf16.msra.mxu0 0
  %1906 = vmatprep.subr.bf16.mxu0 0
  %1907 = vmatpush1.bf16.msra.mxu0 0
  %1908 = vmatprep.subr.bf16.mxu0 0
  %1909 = vmatpush1.bf16.msra.mxu0 0
  %1910 = vmatprep.mubr.bf16.mxu0 0
  %1911 = vmatmul.mubr.bf16.gmra.mrb[0].mxu0 %v1876
  %v1912 = vpop.f32.mrb[0].mxu0
  %v1913 = vadd.f32 %v1850, %v1912
  %v1914 = vpop.f32.mrb[0].mxu0
  %v1915 = vpop.f32.mrb[0].mxu0
  %v1916 = vadd.f32 %v1850, %v1915
  %v1917 = vpop.f32.mrb[0].mxu0
  %1918 = vdwg.mxu0
  %v1919 = vadd.f32 %v1913, %v1731
  %v1920 = vadd.f32 %v1916, %v1732
  %v1921 = vsel %vm161, %v1919, 0.0
  %1922 = vadd.xlane.f32.xlu0 %v1921
  %v1923 = vpop.xlane.xlu0 %1922
  %v1924 = vsel %vm161, %v1920, 0.0
  %1925 = vadd.xlane.f32.xlu0 %v1924
  %v1926 = vpop.xlane.xlu0 %1925
  %v1927 = vmul.f32 %v1923, %v168
  %v1928 = vmul.f32 %v1926, %v168
  %v1929 = vsub.f32 %v1919, %v1927
  %v1930 = vsub.f32 %v1920, %v1928
  %v1931 = vmul.f32 %v1929, %v1929
  %v1932 = vmul.f32 %v1930, %v1930
  %v1933 = vsel %vm161, %v1931, 0.0
  %1934 = vadd.xlane.f32.xlu0 %v1933
  %v1935 = vpop.xlane.xlu0 %1934
  %v1936 = vsel %vm161, %v1932, 0.0
  %1937 = vadd.xlane.f32.xlu0 %v1936
  %v1938 = vpop.xlane.xlu0 %1937
  %v1939 = vmul.f32 %v1935, %v168
  %v1940 = vmul.f32 %v1938, %v168
  %v1941 = vadd.f32 %v1939, 1e-12
  %v1942 = vadd.f32 %v1940, 1e-12
  %v1943 = vrsqrt.pop %v1941
  %v1944 = vrsqrt.pop %v1942
  %v1945 = vmul.f32 %v1929, %v1943
  %v1946 = vmul.f32 %v1930, %v1944
  %v1947 = vld [vmem:[%s3 + $0x10] sm:$0x1]
  %v1948 = vlaneseq
  %v1949 = vshrl.u32 %v1948, 7
  %v1950 = vsub.s32 0, %v1949
  %v1951 = vrot.slane %v1947, %v1950
  %v1952 = vmul.f32 %v1945, %v1951
  %v1953 = vmul.f32 %v1946, %v1951
  %v1954 = vld [vmem:[%s3 + $0x11] sm:$0x1]
  %v1955 = vlaneseq
  %v1956 = vshrl.u32 %v1955, 7
  %v1957 = vsub.s32 0, %v1956
  %v1958 = vrot.slane %v1954, %v1957
  %v1959 = vadd.f32 %v1952, %v1958
  %v1960 = vadd.f32 %v1953, %v1958
  %v1962 = vrot.slane %v1960, 7
  %vm1964 = vcmask 1040384
  %v1965 = vsel %vm1964, %v1959, %v1962
  %vm1966 = vcmask 1041408
  %v1967 = vsel %vm1966, %v1965, 0.0
  %s1968 = scalar_lea.vmem %s4, 64
  %v1969 = vld [vmem:[%s1968] sm:$0xff]
  %v1970 = vld [vmem:[%s1968 + $0x8] sm:$0xff]
  %v1971 = vld [vmem:[%s1968 + $0x10] sm:$0xff]
  %v1972 = vld [vmem:[%s1968 + $0x18] sm:$0xff]
  %v1973 = vpack.c.bf16 %v1967, %v1967
  %v1974 = vld [vmem:[%s3 + $0x12] sm:$0x1]
  %v1975 = vlaneseq
  %v1976 = vshrl.u32 %v1975, 7
  %v1977 = vsub.s32 0, %v1976
  %v1978 = vrot.slane %v1974, %v1977
  %v1983 = vunpack.c.l.b16 %v1969
  %v1984 = vunpack.c.l.b16 %v1970
  %v1985 = vunpack.c.l.b16 %v1971
  %v1986 = vunpack.c.l.b16 %v1972
  %v1987 = vpack.c.b16 %v1984, %v1983
  %v1988 = vpack.c.b16 %v1986, %v1985
  %v1992 = vsel %vm161, %v1973, 0
  %1994 = vmatprep.subr.bf16.mxu0 0
  %1995 = vmatpush1.bf16.msra.mxu0 %v1987
  %1996 = vmatprep.subr.bf16.mxu0 0
  %1997 = vmatpush1.bf16.msra.mxu0 %v1988
  %1998 = vmatprep.subr.bf16.mxu0 0
  %1999 = vmatpush1.bf16.msra.mxu0 0
  %2000 = vmatprep.subr.bf16.mxu0 0
  %2001 = vmatpush1.bf16.msra.mxu0 0
  %2002 = vmatprep.subr.bf16.mxu0 0
  %2003 = vmatpush1.bf16.msra.mxu0 0
  %2004 = vmatprep.subr.bf16.mxu0 0
  %2005 = vmatpush1.bf16.msra.mxu0 0
  %2006 = vmatprep.subr.bf16.mxu0 0
  %2007 = vmatpush1.bf16.msra.mxu0 0
  %2008 = vmatprep.subr.bf16.mxu0 0
  %2009 = vmatpush1.bf16.msra.mxu0 0
  %2010 = vmatprep.subr.bf16.mxu0 0
  %2011 = vmatpush1.bf16.msra.mxu0 0
  %2012 = vmatprep.subr.bf16.mxu0 0
  %2013 = vmatpush1.bf16.msra.mxu0 0
  %2014 = vmatprep.subr.bf16.mxu0 0
  %2015 = vmatpush1.bf16.msra.mxu0 0
  %2016 = vmatprep.subr.bf16.mxu0 0
  %2017 = vmatpush1.bf16.msra.mxu0 0
  %2018 = vmatprep.subr.bf16.mxu0 0
  %2019 = vmatpush1.bf16.msra.mxu0 0
  %2020 = vmatprep.subr.bf16.mxu0 0
  %2021 = vmatpush1.bf16.msra.mxu0 0
  %2022 = vmatprep.subr.bf16.mxu0 0
  %2023 = vmatpush1.bf16.msra.mxu0 0
  %2024 = vmatprep.subr.bf16.mxu0 0
  %2025 = vmatpush1.bf16.msra.mxu0 0
  %2026 = vmatprep.mubr.bf16.mxu0 0
  %2027 = vmatmul.mubr.bf16.gmra.mrb[0].mxu0 %v1992
  %v2028 = vpop.f32.mrb[0].mxu0
  %v2029 = vadd.f32 %v1978, %v2028
  %v2030 = vpop.f32.mrb[0].mxu0
  %v2031 = vpop.f32.mrb[0].mxu0
  %v2032 = vpop.f32.mrb[0].mxu0
  %2033 = vdwg.mxu0
  %2034 = vst [vmem:[%s6] sm:$0xff] %v2029
  // Predicated region
  $region26: #{bert_class_forward.1} parent=0 // pred_check
    _
  $region27: #{bert_class_forward.1} parent=0 // pred_check_branch
    %2036 = sbr.rel (0) target = $region29
  $region28: #{bert_class_forward.1} parent=0 // pred_region
    _
  $region29: #{bert_class_forward.1} parent=0 // pred_fallthru
    _
  // Predicated region
  $region30: #{bert_class_forward.1} parent=0 // pred_check
    _
  $region31: #{bert_class_forward.1} parent=0 // pred_check_branch
    %2038 = sbr.rel (0) target = $region33
  $region32: #{bert_class_forward.1} parent=0 // pred_region
    _
  $region33: #{bert_class_forward.1} parent=0 // pred_fallthru
    _

</llo_original>
